<compile_context>
chip_gen: v7x
topology: tpu7x:2x2x1
jax: 0.10.0
libtpu: 0.0.40
codegen_flags: <defaults>
</compile_context>

<pallas_src>
import jax
import jax.numpy as jnp
from jax.experimental import pallas as pl
from jax.experimental.pallas import tpu as pltpu

HIDDEN = 1024          # fixed by the module
LANE = 128
SUBLANE_BF16 = 16      # bf16 packs 16 rows per vreg


def _round_up(x, m):
    return (x + m - 1) // m * m


def _cdiv(a, b):
    return -(-a // b)


def _chip_profile():
    """Per-generation tiling / VMEM budget heuristic."""
    kind = ""
    try:
        kind = jax.devices()[0].device_kind.lower()
    except Exception:
        pass
    if "v7" in kind:
        # 2 TCs per chip, 64 MiB physical VMEM per TC.
        return {"num_cores": 2, "max_tk": 2048, "vmem_limit": 48 * 1024 * 1024}
    if "v4" in kind or "v5p" in kind:
        # Megacore: 2 TCs share the chip; generous VMEM.
        return {"num_cores": 2, "max_tk": 4096, "vmem_limit": 96 * 1024 * 1024}
    if "v5" in kind or "v6" in kind:
        # Single TC, 128 MiB physical VMEM.
        return {"num_cores": 1, "max_tk": 4096, "vmem_limit": 96 * 1024 * 1024}
    # Unknown / fallback: conservative.
    return {"num_cores": 1, "max_tk": 2048, "vmem_limit": 48 * 1024 * 1024}


# ----------------------------------------------------------------------------
# Kernels
# ----------------------------------------------------------------------------
def _mlp_head_kernel_fused(x_ref, w1_ref, b1_ref, w2_ref, b2_ref, o_ref):
    """nk == 1 fast path: single-shot ReLU(x@W1 + b1) @ W2 + b2 per batch tile."""
    h = jnp.dot(x_ref[...], w1_ref[...], preferred_element_type=jnp.float32)
    h = jnp.maximum(h + b1_ref[...], 0.0)
    out = jnp.dot(h.astype(w2_ref.dtype), w2_ref[...],
                  preferred_element_type=jnp.float32)
    o_ref[...] = (out + b2_ref[...]).astype(o_ref.dtype)


def _mlp_head_kernel_ktiled(x_ref, w1_ref, b1_ref, w2_ref, b2_ref, o_ref, acc_ref):
    """K-tiled path: accumulate x@W1 over the reduction axis, finalize at k==last."""
    k = pl.program_id(1)

    @pl.when(k == 0)
    def _():
        # Seed the accumulator with the broadcast bias: saves a full (TB, H)
        # f32 VPU pass in the finalize step.
        acc_ref[...] = jnp.broadcast_to(b1_ref[...], acc_ref.shape)

    acc_ref[...] += jnp.dot(x_ref[...], w1_ref[...],
                            preferred_element_type=jnp.float32)

    @pl.when(k == pl.num_programs(1) - 1)
    def _():
        h = jnp.maximum(acc_ref[...], 0.0)
        out = jnp.dot(h.astype(w2_ref.dtype), w2_ref[...],
                      preferred_element_type=jnp.float32)
        o_ref[...] = (out + b2_ref[...]).astype(o_ref.dtype)


# ----------------------------------------------------------------------------
# Parameter preparation (done ONCE at load time, not per forward call)
# ----------------------------------------------------------------------------
def prepare_params(w1, b1, w2, b2, compute_dtype=jnp.bfloat16):
    """Cast to bf16 and zero-pad to hardware-friendly shapes once.

    w1: [D, H]  b1: [H]  w2: [H, C]  b2: [C]
    """
    D, H = w1.shape
    C = w2.shape[1]
    assert H == HIDDEN and b1.shape == (H,) and w2.shape[0] == H and b2.shape == (C,)
    Dp = _round_up(D, LANE)
    Cp = _round_up(C, LANE)   # lane-dense output width (unmasked vst)

    w1_p = jnp.zeros((Dp, H), compute_dtype).at[:D, :].set(w1.astype(compute_dtype))
    w2_p = jnp.zeros((H, Cp), compute_dtype).at[:, :C].set(w2.astype(compute_dtype))
    b1_p = b1.astype(jnp.float32).reshape(1, H)
    b2_p = jnp.zeros((1, Cp), jnp.float32).at[0, :C].set(b2.astype(jnp.float32))

    return {"w1": w1_p, "b1": b1_p, "w2": w2_p, "b2": b2_p,
            "D": D, "C": C, "compute_dtype": compute_dtype}


# ----------------------------------------------------------------------------
# Forward wrapper
# ----------------------------------------------------------------------------
def softmax_classifier_forward(x, params, *, block_b=None, block_k=None):
    """Fused eval-mode forward of SoftmaxClassifier.

    x: [B, D] float; params: output of prepare_params.
    returns: [B, C] float32 raw logits (matching the PyTorch module).
    """
    D, C = params["D"], params["C"]
    w1_p, b1_p, w2_p, b2_p = params["w1"], params["b1"], params["w2"], params["b2"]
    compute_dtype = params["compute_dtype"]
    Dp, H = w1_p.shape
    Cp = w2_p.shape[1]

    B = x.shape[0]
    assert x.shape[1] == D

    prof = _chip_profile()
    num_cores = prof["num_cores"]

    # ---- batch tile: nb == #TensorCores so W1 is streamed once per core ------
    if block_b is None:
        tb = _round_up(_cdiv(B, num_cores), SUBLANE_BF16)
    else:
        tb = _round_up(block_b, SUBLANE_BF16)
    tb = min(tb, _round_up(B, SUBLANE_BF16))
    nb = _cdiv(B, tb)
    Bp = nb * tb

    # ---- K tile: largest lane multiple <= per-chip max that divides Dp -------
    max_tk = prof["max_tk"] if block_k is None else _round_up(block_k, LANE)
    tk = min(_round_up(max_tk, LANE), Dp)
    while Dp % tk != 0:
        tk -= LANE
    nk = Dp // tk

    # Per-call activation pad/cast only (weights already packed).
    x_p = jnp.zeros((Bp, Dp), compute_dtype).at[:B, :D].set(x.astype(compute_dtype))

    itemsize = jnp.dtype(compute_dtype).itemsize
    cost = pl.CostEstimate(
        flops=2 * Bp * Dp * H + 2 * Bp * H * Cp,
        transcendentals=0,
        bytes_accessed=(Bp * Dp * itemsize           # x
                        + nb * Dp * H * itemsize     # W1 re-streamed once per batch tile
                        + H * Cp * itemsize          # W2 (constant index -> resident)
                        + (H + Cp) * 4               # biases
                        + Bp * Cp * 4),              # output
    )
    compiler_params = pltpu.CompilerParams(
        dimension_semantics=("parallel",) if nk == 1 else ("parallel", "arbitrary"),
        vmem_limit_bytes=prof["vmem_limit"],
    )

    if nk == 1:
        out_p = pl.pallas_call(
            _mlp_head_kernel_fused,
            out_shape=jax.ShapeDtypeStruct((Bp, Cp), jnp.float32),
            grid_spec=pltpu.PrefetchScalarGridSpec(
                num_scalar_prefetch=0,
                grid=(nb,),
                in_specs=[
                    pl.BlockSpec((tb, Dp), lambda i: (i, 0)),   # x batch tile
                    pl.BlockSpec((Dp, H), lambda i: (0, 0)),    # W1 (resident)
                    pl.BlockSpec((1, H), lambda i: (0, 0)),     # b1 (resident)
                    pl.BlockSpec((H, Cp), lambda i: (0, 0)),    # W2 (resident)
                    pl.BlockSpec((1, Cp), lambda i: (0, 0)),    # b2 (resident)
                ],
                out_specs=pl.BlockSpec((tb, Cp), lambda i: (i, 0)),
            ),
            compiler_params=compiler_params,
            cost_estimate=cost,
        )(x_p, w1_p, b1_p, w2_p, b2_p)
    else:
        out_p = pl.pallas_call(
            _mlp_head_kernel_ktiled,
            out_shape=jax.ShapeDtypeStruct((Bp, Cp), jnp.float32),
            grid_spec=pltpu.PrefetchScalarGridSpec(
                num_scalar_prefetch=0,
                grid=(nb, nk),  # batch tiles (parallel) x K reduction tiles (arbitrary, last)
                in_specs=[
                    pl.BlockSpec((tb, tk), lambda i, k: (i, k)),   # x tile
                    pl.BlockSpec((tk, H), lambda i, k: (k, 0)),    # W1 K-slice
                    pl.BlockSpec((1, H), lambda i, k: (0, 0)),     # b1 (resident)
                    pl.BlockSpec((H, Cp), lambda i, k: (0, 0)),    # W2 (resident)
                    pl.BlockSpec((1, Cp), lambda i, k: (0, 0)),    # b2 (resident)
                ],
                out_specs=pl.BlockSpec((tb, Cp), lambda i, k: (i, 0)),
                scratch_shapes=[pltpu.VMEM((tb, H), jnp.float32)],  # hidden pre-act acc
            ),
            compiler_params=compiler_params,
            cost_estimate=cost,
        )(x_p, w1_p, b1_p, w2_p, b2_p)

    return out_p[:B, :C]


def reference_forward(x, w1, b1, w2, b2, compute_dtype=jnp.bfloat16):
    """Pure-JAX reference with the same mixed-precision recipe as the kernel."""
    xd = x.astype(compute_dtype)
    h = jnp.dot(xd, w1.astype(compute_dtype), preferred_element_type=jnp.float32)
    h = jnp.maximum(h + b1.astype(jnp.float32), 0.0)
    out = jnp.dot(h.astype(compute_dtype), w2.astype(compute_dtype),
                  preferred_element_type=jnp.float32)
    return out + b2.astype(jnp.float32)


if __name__ == "__main__":
    # Small shapes consistent with the module: hidden=1024 is fixed,
    # num_classes=21 (default), input_dim=512 (small demo), ROI batch=32.
    B, D, H, C = 32, 512, HIDDEN, 21

    key = jax.random.PRNGKey(0)
    kx, kw1, kb1, kw2, kb2 = jax.random.split(key, 5)

    x = jax.random.normal(kx, (B, D), dtype=jnp.float32)
    w1 = jax.random.uniform(kw1, (D, H), dtype=jnp.float32,
                            minval=-1.0, maxval=1.0) * (1.0 / jnp.sqrt(D))
    b1 = jax.random.uniform(kb1, (H,), dtype=jnp.float32,
                            minval=-1.0, maxval=1.0) * (1.0 / jnp.sqrt(D))
    w2 = jax.random.uniform(kw2, (H, C), dtype=jnp.float32,
                            minval=-1.0, maxval=1.0) * (1.0 / jnp.sqrt(H))
    b2 = jax.random.uniform(kb2, (C,), dtype=jnp.float32,
                            minval=-1.0, maxval=1.0) * (1.0 / jnp.sqrt(H))

    # Weights packed once (not per forward call).
    params = prepare_params(w1, b1, w2, b2)
    ref = reference_forward(x, w1, b1, w2, b2)

    # Path 1: auto config -> nk == 1 fused fast path.
    out1 = jax.block_until_ready(softmax_classifier_forward(x, params))
    assert out1.shape == (B, C), out1.shape
    assert jnp.allclose(out1, ref, atol=1e-2, rtol=1e-2), (
        "fused-path mismatch: max abs diff = "
        f"{float(jnp.max(jnp.abs(out1 - ref)))}")

    # Path 2: force small K tiles -> exercises the K-tiled accumulator path
    # (the configuration used for input_dim=4096 / 25088).
    out2 = jax.block_until_ready(
        softmax_classifier_forward(x, params, block_k=256))
    assert out2.shape == (B, C), out2.shape
    assert jnp.allclose(out2, ref, atol=1e-2, rtol=1e-2), (
        "k-tiled-path mismatch: max abs diff = "
        f"{float(jnp.max(jnp.abs(out2 - ref)))}")

    print("KERNEL_OK")
</pallas_src>

<mosaic_0001>
module attributes {stable_mosaic.version = 11 : i64} {
  func.func @_mlp_head_kernel_fused(%arg0: i32, %arg1: memref<32x512xbf16, #tpu.memory_space<vmem>>, %arg2: memref<512x1024xbf16, #tpu.memory_space<vmem>>, %arg3: memref<1x1024xf32, #tpu.memory_space<vmem>>, %arg4: memref<1024x128xbf16, #tpu.memory_space<vmem>>, %arg5: memref<1x128xf32, #tpu.memory_space<vmem>>, %arg6: memref<32x128xf32, #tpu.memory_space<vmem>>) attributes {dimension_semantics = [#tpu.dimension_semantics<parallel>], iteration_bounds = array<i64: 1>, scalar_prefetch = 0 : i64, scratch_operands = 0 : i64, tpu.core_type = #tpu.core_type<tc>, window_params = [{transform_indices = @transform_0, window_bounds = array<i64: 32, 512>}, {pipeline_mode = #tpu.pipeline_mode<synchronous>, transform_indices = @transform_1, window_bounds = array<i64: 512, 1024>}, {pipeline_mode = #tpu.pipeline_mode<synchronous>, transform_indices = @transform_2, window_bounds = array<i64: 1, 1024>}, {pipeline_mode = #tpu.pipeline_mode<synchronous>, transform_indices = @transform_3, window_bounds = array<i64: 1024, 128>}, {pipeline_mode = #tpu.pipeline_mode<synchronous>, transform_indices = @transform_4, window_bounds = array<i64: 1, 128>}, {transform_indices = @transform_5, window_bounds = array<i64: 32, 128>}]} {
    %c0 = arith.constant 0 : index
    %c0_0 = arith.constant 0 : index
    %0 = vector.load %arg1[%c0, %c0_0] : memref<32x512xbf16, #tpu.memory_space<vmem>>, vector<32x512xbf16>
    %c0_1 = arith.constant 0 : index
    %c0_2 = arith.constant 0 : index
    %1 = vector.load %arg2[%c0_1, %c0_2] : memref<512x1024xbf16, #tpu.memory_space<vmem>>, vector<512x1024xbf16>
    %cst = arith.constant dense<0.000000e+00> : vector<32x1024xf32>
    %2 = tpu.matmul %0, %1, %cst {dimension_numbers = #tpu.dot_dimension_numbers<[1], [0], [0], [1], [0, 0, 1, 1], [], []>} : vector<32x512xbf16>, vector<512x1024xbf16>, vector<32x1024xf32> -> vector<32x1024xf32>
    %c0_3 = arith.constant 0 : index
    %c0_4 = arith.constant 0 : index
    %3 = vector.load %arg3[%c0_3, %c0_4] : memref<1x1024xf32, #tpu.memory_space<vmem>>, vector<1x1024xf32>
    %4 = vector.broadcast %3 : vector<1x1024xf32> to vector<32x1024xf32>
    %5 = arith.addf %2, %4 : vector<32x1024xf32>
    %cst_5 = arith.constant 0.000000e+00 : f32
    %6 = vector.broadcast %cst_5 : f32 to vector<32x1024xf32>
    %7 = arith.maximumf %5, %6 : vector<32x1024xf32>
    %8 = arith.truncf %7 : vector<32x1024xf32> to vector<32x1024xbf16>
    %c0_6 = arith.constant 0 : index
    %c0_7 = arith.constant 0 : index
    %9 = vector.load %arg4[%c0_6, %c0_7] : memref<1024x128xbf16, #tpu.memory_space<vmem>>, vector<1024x128xbf16>
    %cst_8 = arith.constant dense<0.000000e+00> : vector<32x128xf32>
    %10 = tpu.matmul %8, %9, %cst_8 {dimension_numbers = #tpu.dot_dimension_numbers<[1], [0], [0], [1], [0, 0, 1, 1], [], []>} : vector<32x1024xbf16>, vector<1024x128xbf16>, vector<32x128xf32> -> vector<32x128xf32>
    %c0_9 = arith.constant 0 : index
    %c0_10 = arith.constant 0 : index
    %11 = vector.load %arg5[%c0_9, %c0_10] : memref<1x128xf32, #tpu.memory_space<vmem>>, vector<1x128xf32>
    %12 = vector.broadcast %11 : vector<1x128xf32> to vector<32x128xf32>
    %13 = arith.addf %10, %12 : vector<32x128xf32>
    %c0_11 = arith.constant 0 : index
    %c0_12 = arith.constant 0 : index
    %14 = vector.load %arg6[%c0_11, %c0_12] : memref<32x128xf32, #tpu.memory_space<vmem>>, vector<32x128xf32>
    tpu.vector_store %arg6[%c0_11, %c0_12], %13 {strides = array<i32>} : memref<32x128xf32, #tpu.memory_space<vmem>>, vector<32x128xf32>,
    return
  }
  func.func @transform_0(%arg0: i32) -> (i32, i32) {
    %c0_i32 = arith.constant 0 : i32
    %c0_i32_0 = arith.constant 0 : i32
    return %arg0, %c0_i32 : i32, i32
  }
  func.func @transform_1(%arg0: i32) -> (i32, i32) {
    %c0_i32 = arith.constant 0 : i32
    %c0_i32_0 = arith.constant 0 : i32
    %c0_i32_1 = arith.constant 0 : i32
    return %c0_i32, %c0_i32_0 : i32, i32
  }
  func.func @transform_2(%arg0: i32) -> (i32, i32) {
    %c0_i32 = arith.constant 0 : i32
    %c0_i32_0 = arith.constant 0 : i32
    %c0_i32_1 = arith.constant 0 : i32
    return %c0_i32, %c0_i32_0 : i32, i32
  }
  func.func @transform_3(%arg0: i32) -> (i32, i32) {
    %c0_i32 = arith.constant 0 : i32
    %c0_i32_0 = arith.constant 0 : i32
    %c0_i32_1 = arith.constant 0 : i32
    return %c0_i32, %c0_i32_0 : i32, i32
  }
  func.func @transform_4(%arg0: i32) -> (i32, i32) {
    %c0_i32 = arith.constant 0 : i32
    %c0_i32_0 = arith.constant 0 : i32
    %c0_i32_1 = arith.constant 0 : i32
    return %c0_i32, %c0_i32_0 : i32, i32
  }
  func.func @transform_5(%arg0: i32) -> (i32, i32) {
    %c0_i32 = arith.constant 0 : i32
    %c0_i32_0 = arith.constant 0 : i32
    return %arg0, %c0_i32 : i32, i32
  }
}

</mosaic_0001>

<llo_original>
// kernel: tpu_custom_call.1
$region0: #{tpu_custom_call.1}
  #allocation0 [shape = 'u32[]', space=smem, size = 0x4, offset = 0x4, fixed_abs, tag = 'smem constant byte address 0x4 - core index']
  #allocation1 [shape = 'u32[144,128]{1,0:T(1,128)}', space=vmem, size = 0x12000, scoped, tag = 'internal scratch']
  %s0 = inlined_call_operand.hbm [shape: bf16[32,512], index: 0, kind: input, shape index: {}]
  %s1 = inlined_call_operand.hbm [shape: bf16[512,1024], index: 1, kind: input, shape index: {}]
  %s2 = inlined_call_operand.hbm [shape: f32[1,1024], index: 2, kind: input, shape index: {}]
  %s3 = inlined_call_operand.hbm [shape: bf16[1024,128], index: 3, kind: input, shape index: {}]
  %s4 = inlined_call_operand.vmem [shape: f32[1,128], index: 4, kind: input, shape index: {}]
  %s5 = inlined_call_operand.hbm [shape: f32[32,128], index: 5, kind: output, shape index: {}]
  %s6 = sld [smem:[#allocation0]]
  $region46: #{tpu_custom_call.1} parent=0
    _
  %s8 = ssub.s32 1, %s6
  %s9 = scalar_select 0, %s8, %s6
  $region1: #{tpu_custom_call.1} parent=0
    #allocation2 [shape = 'u8[32768]{0}', space=vmem, size = 0x8000, scoped, tag = 'input window, operand 0, single buffered']
    #allocation3 [shape = 's32[1]{0}', space=sflag, size = 0x4, scoped, tag = 'scoped memory for tpu_custom_call.1']
    #allocation4 [shape = 's32[1]{0}', space=sflag, size = 0x4, scoped, tag = 'scoped memory for tpu_custom_call.1']
    #allocation5 [shape = 'u8[1048576]{0}', space=vmem, size = 0x100000, scoped, tag = 'input window, operand 1, single buffered']
    #allocation6 [shape = 's32[1]{0}', space=sflag, size = 0x4, scoped, tag = 'scoped memory for tpu_custom_call.1']
    #allocation7 [shape = 'u8[4096]{0}', space=vmem, size = 0x1000, scoped, tag = 'input window, operand 2, single buffered']
    #allocation8 [shape = 'u8[262144]{0}', space=vmem, size = 0x40000, scoped, tag = 'input window, operand 3, single buffered']
    #allocation9 [shape = 's32[1]{0}', space=sflag, size = 0x4, scoped, tag = 'scoped memory for tpu_custom_call.1']
    #allocation10 [shape = 'u8[16384]{0}', space=vmem, size = 0x4000, scoped, tag = 'output window, operand 0, single buffered']
    %10 = vsyncpa [#allocation3], 0
    %11 = vsyncpa [#allocation6], 0
    %12 = vsyncpa [#allocation9], 0
    %13 = vsyncpa [#allocation4], 0
    // Predicated region
    $region2: #{tpu_custom_call.1} parent=1 // pred_check
      _
    $region3: #{tpu_custom_call.1} parent=1 // pred_check_branch
      %15 = sbr.rel (0) target = $region5
    $region4: #{tpu_custom_call.1} parent=1 // pred_region
      %s17 = ssub.s32 1024, 1024
      %18 = vsyncadd [#allocation3], %s17
      %s19 = sshll.u32 [#allocation2], 4
      %s20 = int_to_ptr.vmem [resolvable:$true] %s19
      %25 = dma.hbm_to_vmem [thread:$0]  %s0, 1024, %s20, [#allocation3], 256, 256, 16
    $region5: #{tpu_custom_call.1} parent=1 // pred_fallthru
      _
    // Predicated region
    $region6: #{tpu_custom_call.1} parent=1 // pred_check
      _
    $region7: #{tpu_custom_call.1} parent=1 // pred_check_branch
      %27 = sbr.rel (0) target = $region9
    $region8: #{tpu_custom_call.1} parent=1 // pred_region
      %s29 = ssub.s32 32768, 32768
      %30 = vsyncadd [#allocation6], %s29
      %s31 = sshll.u32 [#allocation5], 4
      %s32 = int_to_ptr.vmem [resolvable:$true] %s31
      %37 = dma.hbm_to_vmem [thread:$0]  %s1, 32768, %s32, [#allocation6], 512, 512, 32
    $region9: #{tpu_custom_call.1} parent=1 // pred_fallthru
      _
    // Predicated region
    $region10: #{tpu_custom_call.1} parent=1 // pred_check
      _
    $region11: #{tpu_custom_call.1} parent=1 // pred_check_branch
      %39 = sbr.rel (0) target = $region13
    $region12: #{tpu_custom_call.1} parent=1 // pred_region
      %s41 = ssub.s32 128, 128
      %42 = vsyncadd [#allocation6], %s41
      %s44 = sshll.u32 [#allocation7], 4
      %s45 = int_to_ptr.vmem [resolvable:$true] %s44
      %47 = dma.hbm_to_vmem [thread:$0]  %s2, 128, %s45, [#allocation6]
    $region13: #{tpu_custom_call.1} parent=1 // pred_fallthru
      _
    // Predicated region
    $region14: #{tpu_custom_call.1} parent=1 // pred_check
      _
    $region15: #{tpu_custom_call.1} parent=1 // pred_check_branch
      %49 = sbr.rel (0) target = $region17
    $region16: #{tpu_custom_call.1} parent=1 // pred_region
      %s51 = ssub.s32 8192, 8192
      %52 = vsyncadd [#allocation9], %s51
      %s53 = sshll.u32 [#allocation8], 4
      %s54 = int_to_ptr.vmem [resolvable:$true] %s53
      %59 = dma.hbm_to_vmem [thread:$0]  %s3, 8192, %s54, [#allocation9], 64, 64, 4
    $region17: #{tpu_custom_call.1} parent=1 // pred_fallthru
      _
    // Predicated region
    $region18: #{tpu_custom_call.1} parent=1 // pred_check
      _
    $region19: #{tpu_custom_call.1} parent=1 // pred_check_branch
      %61 = sbr.rel (0) target = $region21
    $region20: #{tpu_custom_call.1} parent=1 // pred_region
      _
    $region21: #{tpu_custom_call.1} parent=1 // pred_fallthru
      _
    // Predicated region
    $region22: #{tpu_custom_call.1} parent=1 // pred_check
      _
    $region23: #{tpu_custom_call.1} parent=1 // pred_check_branch
      %63 = sbr.rel (0) target = $region25
    $region24: #{tpu_custom_call.1} parent=1 // pred_region
      %64 = dma.done [#allocation3], 1024
    $region25: #{tpu_custom_call.1} parent=1 // pred_fallthru
      _
    // Predicated region
    $region26: #{tpu_custom_call.1} parent=1 // pred_check
      _
    $region27: #{tpu_custom_call.1} parent=1 // pred_check_branch
      %66 = sbr.rel (0) target = $region29
    $region28: #{tpu_custom_call.1} parent=1 // pred_region
      %67 = dma.done [#allocation6], 32768
    $region29: #{tpu_custom_call.1} parent=1 // pred_fallthru
      _
    // Predicated region
    $region30: #{tpu_custom_call.1} parent=1 // pred_check
      _
    $region31: #{tpu_custom_call.1} parent=1 // pred_check_branch
      %69 = sbr.rel (0) target = $region33
    $region32: #{tpu_custom_call.1} parent=1 // pred_region
      %70 = dma.done [#allocation6], 128
    $region33: #{tpu_custom_call.1} parent=1 // pred_fallthru
      _
    // Predicated region
    $region34: #{tpu_custom_call.1} parent=1 // pred_check
      _
    $region35: #{tpu_custom_call.1} parent=1 // pred_check_branch
      %72 = sbr.rel (0) target = $region37
    $region36: #{tpu_custom_call.1} parent=1 // pred_region
      %73 = dma.done [#allocation9], 8192
    $region37: #{tpu_custom_call.1} parent=1 // pred_fallthru
      _
    %v75 = vld [vmem:[#allocation2] sm:$0xff]
    %v76 = vld [vmem:[#allocation2 + $0x8] sm:$0xff]
    %v77 = vld [vmem:[#allocation2 + $0x10] sm:$0xff]
    %v78 = vld [vmem:[#allocation2 + $0x18] sm:$0xff]
    %v79 = vld [vmem:[#allocation2 + $0x20] sm:$0xff]
    %v80 = vld [vmem:[#allocation2 + $0x28] sm:$0xff]
    %v81 = vld [vmem:[#allocation2 + $0x30] sm:$0xff]
    %v82 = vld [vmem:[#allocation2 + $0x38] sm:$0xff]
    %v83 = vld [vmem:[#allocation5] sm:$0xff]
    %v84 = vld [vmem:[#allocation5 + $0x8] sm:$0xff]
    %v85 = vld [vmem:[#allocation5 + $0x10] sm:$0xff]
    %v86 = vld [vmem:[#allocation5 + $0x18] sm:$0xff]
    %v87 = vld [vmem:[#allocation5 + $0x20] sm:$0xff]
    %v88 = vld [vmem:[#allocation5 + $0x28] sm:$0xff]
    %v89 = vld [vmem:[#allocation5 + $0x30] sm:$0xff]
    %v90 = vld [vmem:[#allocation5 + $0x38] sm:$0xff]
    %v91 = vld [vmem:[#allocation5 + $0x40] sm:$0xff]
    %v92 = vld [vmem:[#allocation5 + $0x48] sm:$0xff]
    %v93 = vld [vmem:[#allocation5 + $0x50] sm:$0xff]
    %v94 = vld [vmem:[#allocation5 + $0x58] sm:$0xff]
    %v95 = vld [vmem:[#allocation5 + $0x60] sm:$0xff]
    %v96 = vld [vmem:[#allocation5 + $0x68] sm:$0xff]
    %v97 = vld [vmem:[#allocation5 + $0x70] sm:$0xff]
    %v98 = vld [vmem:[#allocation5 + $0x78] sm:$0xff]
    %v99 = vld [vmem:[#allocation5 + $0x80] sm:$0xff]
    %v100 = vld [vmem:[#allocation5 + $0x88] sm:$0xff]
    %v101 = vld [vmem:[#allocation5 + $0x90] sm:$0xff]
    %v102 = vld [vmem:[#allocation5 + $0x98] sm:$0xff]
    %v103 = vld [vmem:[#allocation5 + $0xa0] sm:$0xff]
    %v104 = vld [vmem:[#allocation5 + $0xa8] sm:$0xff]
    %v105 = vld [vmem:[#allocation5 + $0xb0] sm:$0xff]
    %v106 = vld [vmem:[#allocation5 + $0xb8] sm:$0xff]
    %v107 = vld [vmem:[#allocation5 + $0xc0] sm:$0xff]
    %v108 = vld [vmem:[#allocation5 + $0xc8] sm:$0xff]
    %v109 = vld [vmem:[#allocation5 + $0xd0] sm:$0xff]
    %v110 = vld [vmem:[#allocation5 + $0xd8] sm:$0xff]
    %v111 = vld [vmem:[#allocation5 + $0xe0] sm:$0xff]
    %v112 = vld [vmem:[#allocation5 + $0xe8] sm:$0xff]
    %v113 = vld [vmem:[#allocation5 + $0xf0] sm:$0xff]
    %v114 = vld [vmem:[#allocation5 + $0xf8] sm:$0xff]
    %v115 = vld [vmem:[#allocation5 + $0x100] sm:$0xff]
    %v116 = vld [vmem:[#allocation5 + $0x108] sm:$0xff]
    %v117 = vld [vmem:[#allocation5 + $0x110] sm:$0xff]
    %v118 = vld [vmem:[#allocation5 + $0x118] sm:$0xff]
    %v119 = vld [vmem:[#allocation5 + $0x120] sm:$0xff]
    %v120 = vld [vmem:[#allocation5 + $0x128] sm:$0xff]
    %v121 = vld [vmem:[#allocation5 + $0x130] sm:$0xff]
    %v122 = vld [vmem:[#allocation5 + $0x138] sm:$0xff]
    %v123 = vld [vmem:[#allocation5 + $0x140] sm:$0xff]
    %v124 = vld [vmem:[#allocation5 + $0x148] sm:$0xff]
    %v125 = vld [vmem:[#allocation5 + $0x150] sm:$0xff]
    %v126 = vld [vmem:[#allocation5 + $0x158] sm:$0xff]
    %v127 = vld [vmem:[#allocation5 + $0x160] sm:$0xff]
    %v128 = vld [vmem:[#allocation5 + $0x168] sm:$0xff]
    %v129 = vld [vmem:[#allocation5 + $0x170] sm:$0xff]
    %v130 = vld [vmem:[#allocation5 + $0x178] sm:$0xff]
    %v131 = vld [vmem:[#allocation5 + $0x180] sm:$0xff]
    %v132 = vld [vmem:[#allocation5 + $0x188] sm:$0xff]
    %v133 = vld [vmem:[#allocation5 + $0x190] sm:$0xff]
    %v134 = vld [vmem:[#allocation5 + $0x198] sm:$0xff]
    %v135 = vld [vmem:[#allocation5 + $0x1a0] sm:$0xff]
    %v136 = vld [vmem:[#allocation5 + $0x1a8] sm:$0xff]
    %v137 = vld [vmem:[#allocation5 + $0x1b0] sm:$0xff]
    %v138 = vld [vmem:[#allocation5 + $0x1b8] sm:$0xff]
    %v139 = vld [vmem:[#allocation5 + $0x1c0] sm:$0xff]
    %v140 = vld [vmem:[#allocation5 + $0x1c8] sm:$0xff]
    %v141 = vld [vmem:[#allocation5 + $0x1d0] sm:$0xff]
    %v142 = vld [vmem:[#allocation5 + $0x1d8] sm:$0xff]
    %v143 = vld [vmem:[#allocation5 + $0x1e0] sm:$0xff]
    %v144 = vld [vmem:[#allocation5 + $0x1e8] sm:$0xff]
    %v145 = vld [vmem:[#allocation5 + $0x1f0] sm:$0xff]
    %v146 = vld [vmem:[#allocation5 + $0x1f8] sm:$0xff]
    %v147 = vld [vmem:[#allocation5 + $0x200] sm:$0xff]
    %v148 = vld [vmem:[#allocation5 + $0x208] sm:$0xff]
    %v149 = vld [vmem:[#allocation5 + $0x210] sm:$0xff]
    %v150 = vld [vmem:[#allocation5 + $0x218] sm:$0xff]
    %v151 = vld [vmem:[#allocation5 + $0x220] sm:$0xff]
    %v152 = vld [vmem:[#allocation5 + $0x228] sm:$0xff]
    %v153 = vld [vmem:[#allocation5 + $0x230] sm:$0xff]
    %v154 = vld [vmem:[#allocation5 + $0x238] sm:$0xff]
    %v155 = vld [vmem:[#allocation5 + $0x240] sm:$0xff]
    %v156 = vld [vmem:[#allocation5 + $0x248] sm:$0xff]
    %v157 = vld [vmem:[#allocation5 + $0x250] sm:$0xff]
    %v158 = vld [vmem:[#allocation5 + $0x258] sm:$0xff]
    %v159 = vld [vmem:[#allocation5 + $0x260] sm:$0xff]
    %v160 = vld [vmem:[#allocation5 + $0x268] sm:$0xff]
    %v161 = vld [vmem:[#allocation5 + $0x270] sm:$0xff]
    %v162 = vld [vmem:[#allocation5 + $0x278] sm:$0xff]
    %v163 = vld [vmem:[#allocation5 + $0x280] sm:$0xff]
    %v164 = vld [vmem:[#allocation5 + $0x288] sm:$0xff]
    %v165 = vld [vmem:[#allocation5 + $0x290] sm:$0xff]
    %v166 = vld [vmem:[#allocation5 + $0x298] sm:$0xff]
    %v167 = vld [vmem:[#allocation5 + $0x2a0] sm:$0xff]
    %v168 = vld [vmem:[#allocation5 + $0x2a8] sm:$0xff]
    %v169 = vld [vmem:[#allocation5 + $0x2b0] sm:$0xff]
    %v170 = vld [vmem:[#allocation5 + $0x2b8] sm:$0xff]
    %v171 = vld [vmem:[#allocation5 + $0x2c0] sm:$0xff]
    %v172 = vld [vmem:[#allocation5 + $0x2c8] sm:$0xff]
    %v173 = vld [vmem:[#allocation5 + $0x2d0] sm:$0xff]
    %v174 = vld [vmem:[#allocation5 + $0x2d8] sm:$0xff]
    %v175 = vld [vmem:[#allocation5 + $0x2e0] sm:$0xff]
    %v176 = vld [vmem:[#allocation5 + $0x2e8] sm:$0xff]
    %v177 = vld [vmem:[#allocation5 + $0x2f0] sm:$0xff]
    %v178 = vld [vmem:[#allocation5 + $0x2f8] sm:$0xff]
    %v179 = vld [vmem:[#allocation5 + $0x300] sm:$0xff]
    %v180 = vld [vmem:[#allocation5 + $0x308] sm:$0xff]
    %v181 = vld [vmem:[#allocation5 + $0x310] sm:$0xff]
    %v182 = vld [vmem:[#allocation5 + $0x318] sm:$0xff]
    %v183 = vld [vmem:[#allocation5 + $0x320] sm:$0xff]
    %v184 = vld [vmem:[#allocation5 + $0x328] sm:$0xff]
    %v185 = vld [vmem:[#allocation5 + $0x330] sm:$0xff]
    %v186 = vld [vmem:[#allocation5 + $0x338] sm:$0xff]
    %v187 = vld [vmem:[#allocation5 + $0x340] sm:$0xff]
    %v188 = vld [vmem:[#allocation5 + $0x348] sm:$0xff]
    %v189 = vld [vmem:[#allocation5 + $0x350] sm:$0xff]
    %v190 = vld [vmem:[#allocation5 + $0x358] sm:$0xff]
    %v191 = vld [vmem:[#allocation5 + $0x360] sm:$0xff]
    %v192 = vld [vmem:[#allocation5 + $0x368] sm:$0xff]
    %v193 = vld [vmem:[#allocation5 + $0x370] sm:$0xff]
    %v194 = vld [vmem:[#allocation5 + $0x378] sm:$0xff]
    %v195 = vld [vmem:[#allocation5 + $0x380] sm:$0xff]
    %v196 = vld [vmem:[#allocation5 + $0x388] sm:$0xff]
    %v197 = vld [vmem:[#allocation5 + $0x390] sm:$0xff]
    %v198 = vld [vmem:[#allocation5 + $0x398] sm:$0xff]
    %v199 = vld [vmem:[#allocation5 + $0x3a0] sm:$0xff]
    %v200 = vld [vmem:[#allocation5 + $0x3a8] sm:$0xff]
    %v201 = vld [vmem:[#allocation5 + $0x3b0] sm:$0xff]
    %v202 = vld [vmem:[#allocation5 + $0x3b8] sm:$0xff]
    %v203 = vld [vmem:[#allocation5 + $0x3c0] sm:$0xff]
    %v204 = vld [vmem:[#allocation5 + $0x3c8] sm:$0xff]
    %v205 = vld [vmem:[#allocation5 + $0x3d0] sm:$0xff]
    %v206 = vld [vmem:[#allocation5 + $0x3d8] sm:$0xff]
    %v207 = vld [vmem:[#allocation5 + $0x3e0] sm:$0xff]
    %v208 = vld [vmem:[#allocation5 + $0x3e8] sm:$0xff]
    %v209 = vld [vmem:[#allocation5 + $0x3f0] sm:$0xff]
    %v210 = vld [vmem:[#allocation5 + $0x3f8] sm:$0xff]
    %v211 = vld [vmem:[#allocation5 + $0x400] sm:$0xff]
    %v212 = vld [vmem:[#allocation5 + $0x408] sm:$0xff]
    %v213 = vld [vmem:[#allocation5 + $0x410] sm:$0xff]
    %v214 = vld [vmem:[#allocation5 + $0x418] sm:$0xff]
    %v215 = vld [vmem:[#allocation5 + $0x420] sm:$0xff]
    %v216 = vld [vmem:[#allocation5 + $0x428] sm:$0xff]
    %v217 = vld [vmem:[#allocation5 + $0x430] sm:$0xff]
    %v218 = vld [vmem:[#allocation5 + $0x438] sm:$0xff]
    %v219 = vld [vmem:[#allocation5 + $0x440] sm:$0xff]
    %v220 = vld [vmem:[#allocation5 + $0x448] sm:$0xff]
    %v221 = vld [vmem:[#allocation5 + $0x450] sm:$0xff]
    %v222 = vld [vmem:[#allocation5 + $0x458] sm:$0xff]
    %v223 = vld [vmem:[#allocation5 + $0x460] sm:$0xff]
    %v224 = vld [vmem:[#allocation5 + $0x468] sm:$0xff]
    %v225 = vld [vmem:[#allocation5 + $0x470] sm:$0xff]
    %v226 = vld [vmem:[#allocation5 + $0x478] sm:$0xff]
    %v227 = vld [vmem:[#allocation5 + $0x480] sm:$0xff]
    %v228 = vld [vmem:[#allocation5 + $0x488] sm:$0xff]
    %v229 = vld [vmem:[#allocation5 + $0x490] sm:$0xff]
    %v230 = vld [vmem:[#allocation5 + $0x498] sm:$0xff]
    %v231 = vld [vmem:[#allocation5 + $0x4a0] sm:$0xff]
    %v232 = vld [vmem:[#allocation5 + $0x4a8] sm:$0xff]
    %v233 = vld [vmem:[#allocation5 + $0x4b0] sm:$0xff]
    %v234 = vld [vmem:[#allocation5 + $0x4b8] sm:$0xff]
    %v235 = vld [vmem:[#allocation5 + $0x4c0] sm:$0xff]
    %v236 = vld [vmem:[#allocation5 + $0x4c8] sm:$0xff]
    %v237 = vld [vmem:[#allocation5 + $0x4d0] sm:$0xff]
    %v238 = vld [vmem:[#allocation5 + $0x4d8] sm:$0xff]
    %v239 = vld [vmem:[#allocation5 + $0x4e0] sm:$0xff]
    %v240 = vld [vmem:[#allocation5 + $0x4e8] sm:$0xff]
    %v241 = vld [vmem:[#allocation5 + $0x4f0] sm:$0xff]
    %v242 = vld [vmem:[#allocation5 + $0x4f8] sm:$0xff]
    %v243 = vld [vmem:[#allocation5 + $0x500] sm:$0xff]
    %v244 = vld [vmem:[#allocation5 + $0x508] sm:$0xff]
    %v245 = vld [vmem:[#allocation5 + $0x510] sm:$0xff]
    %v246 = vld [vmem:[#allocation5 + $0x518] sm:$0xff]
    %v247 = vld [vmem:[#allocation5 + $0x520] sm:$0xff]
    %v248 = vld [vmem:[#allocation5 + $0x528] sm:$0xff]
    %v249 = vld [vmem:[#allocation5 + $0x530] sm:$0xff]
    %v250 = vld [vmem:[#allocation5 + $0x538] sm:$0xff]
    %v251 = vld [vmem:[#allocation5 + $0x540] sm:$0xff]
    %v252 = vld [vmem:[#allocation5 + $0x548] sm:$0xff]
    %v253 = vld [vmem:[#allocation5 + $0x550] sm:$0xff]
    %v254 = vld [vmem:[#allocation5 + $0x558] sm:$0xff]
    %v255 = vld [vmem:[#allocation5 + $0x560] sm:$0xff]
    %v256 = vld [vmem:[#allocation5 + $0x568] sm:$0xff]
    %v257 = vld [vmem:[#allocation5 + $0x570] sm:$0xff]
    %v258 = vld [vmem:[#allocation5 + $0x578] sm:$0xff]
    %v259 = vld [vmem:[#allocation5 + $0x580] sm:$0xff]
    %v260 = vld [vmem:[#allocation5 + $0x588] sm:$0xff]
    %v261 = vld [vmem:[#allocation5 + $0x590] sm:$0xff]
    %v262 = vld [vmem:[#allocation5 + $0x598] sm:$0xff]
    %v263 = vld [vmem:[#allocation5 + $0x5a0] sm:$0xff]
    %v264 = vld [vmem:[#allocation5 + $0x5a8] sm:$0xff]
    %v265 = vld [vmem:[#allocation5 + $0x5b0] sm:$0xff]
    %v266 = vld [vmem:[#allocation5 + $0x5b8] sm:$0xff]
    %v267 = vld [vmem:[#allocation5 + $0x5c0] sm:$0xff]
    %v268 = vld [vmem:[#allocation5 + $0x5c8] sm:$0xff]
    %v269 = vld [vmem:[#allocation5 + $0x5d0] sm:$0xff]
    %v270 = vld [vmem:[#allocation5 + $0x5d8] sm:$0xff]
    %v271 = vld [vmem:[#allocation5 + $0x5e0] sm:$0xff]
    %v272 = vld [vmem:[#allocation5 + $0x5e8] sm:$0xff]
    %v273 = vld [vmem:[#allocation5 + $0x5f0] sm:$0xff]
    %v274 = vld [vmem:[#allocation5 + $0x5f8] sm:$0xff]
    %v275 = vld [vmem:[#allocation5 + $0x600] sm:$0xff]
    %v276 = vld [vmem:[#allocation5 + $0x608] sm:$0xff]
    %v277 = vld [vmem:[#allocation5 + $0x610] sm:$0xff]
    %v278 = vld [vmem:[#allocation5 + $0x618] sm:$0xff]
    %v279 = vld [vmem:[#allocation5 + $0x620] sm:$0xff]
    %v280 = vld [vmem:[#allocation5 + $0x628] sm:$0xff]
    %v281 = vld [vmem:[#allocation5 + $0x630] sm:$0xff]
    %v282 = vld [vmem:[#allocation5 + $0x638] sm:$0xff]
    %v283 = vld [vmem:[#allocation5 + $0x640] sm:$0xff]
    %v284 = vld [vmem:[#allocation5 + $0x648] sm:$0xff]
    %v285 = vld [vmem:[#allocation5 + $0x650] sm:$0xff]
    %v286 = vld [vmem:[#allocation5 + $0x658] sm:$0xff]
    %v287 = vld [vmem:[#allocation5 + $0x660] sm:$0xff]
    %v288 = vld [vmem:[#allocation5 + $0x668] sm:$0xff]
    %v289 = vld [vmem:[#allocation5 + $0x670] sm:$0xff]
    %v290 = vld [vmem:[#allocation5 + $0x678] sm:$0xff]
    %v291 = vld [vmem:[#allocation5 + $0x680] sm:$0xff]
    %v292 = vld [vmem:[#allocation5 + $0x688] sm:$0xff]
    %v293 = vld [vmem:[#allocation5 + $0x690] sm:$0xff]
    %v294 = vld [vmem:[#allocation5 + $0x698] sm:$0xff]
    %v295 = vld [vmem:[#allocation5 + $0x6a0] sm:$0xff]
    %v296 = vld [vmem:[#allocation5 + $0x6a8] sm:$0xff]
    %v297 = vld [vmem:[#allocation5 + $0x6b0] sm:$0xff]
    %v298 = vld [vmem:[#allocation5 + $0x6b8] sm:$0xff]
    %v299 = vld [vmem:[#allocation5 + $0x6c0] sm:$0xff]
    %v300 = vld [vmem:[#allocation5 + $0x6c8] sm:$0xff]
    %v301 = vld [vmem:[#allocation5 + $0x6d0] sm:$0xff]
    %v302 = vld [vmem:[#allocation5 + $0x6d8] sm:$0xff]
    %v303 = vld [vmem:[#allocation5 + $0x6e0] sm:$0xff]
    %v304 = vld [vmem:[#allocation5 + $0x6e8] sm:$0xff]
    %v305 = vld [vmem:[#allocation5 + $0x6f0] sm:$0xff]
    %v306 = vld [vmem:[#allocation5 + $0x6f8] sm:$0xff]
    %v307 = vld [vmem:[#allocation5 + $0x700] sm:$0xff]
    %v308 = vld [vmem:[#allocation5 + $0x708] sm:$0xff]
    %v309 = vld [vmem:[#allocation5 + $0x710] sm:$0xff]
    %v310 = vld [vmem:[#allocation5 + $0x718] sm:$0xff]
    %v311 = vld [vmem:[#allocation5 + $0x720] sm:$0xff]
    %v312 = vld [vmem:[#allocation5 + $0x728] sm:$0xff]
    %v313 = vld [vmem:[#allocation5 + $0x730] sm:$0xff]
    %v314 = vld [vmem:[#allocation5 + $0x738] sm:$0xff]
    %v315 = vld [vmem:[#allocation5 + $0x740] sm:$0xff]
    %v316 = vld [vmem:[#allocation5 + $0x748] sm:$0xff]
    %v317 = vld [vmem:[#allocation5 + $0x750] sm:$0xff]
    %v318 = vld [vmem:[#allocation5 + $0x758] sm:$0xff]
    %v319 = vld [vmem:[#allocation5 + $0x760] sm:$0xff]
    %v320 = vld [vmem:[#allocation5 + $0x768] sm:$0xff]
    %v321 = vld [vmem:[#allocation5 + $0x770] sm:$0xff]
    %v322 = vld [vmem:[#allocation5 + $0x778] sm:$0xff]
    %v323 = vld [vmem:[#allocation5 + $0x780] sm:$0xff]
    %v324 = vld [vmem:[#allocation5 + $0x788] sm:$0xff]
    %v325 = vld [vmem:[#allocation5 + $0x790] sm:$0xff]
    %v326 = vld [vmem:[#allocation5 + $0x798] sm:$0xff]
    %v327 = vld [vmem:[#allocation5 + $0x7a0] sm:$0xff]
    %v328 = vld [vmem:[#allocation5 + $0x7a8] sm:$0xff]
    %v329 = vld [vmem:[#allocation5 + $0x7b0] sm:$0xff]
    %v330 = vld [vmem:[#allocation5 + $0x7b8] sm:$0xff]
    %v331 = vld [vmem:[#allocation5 + $0x7c0] sm:$0xff]
    %v332 = vld [vmem:[#allocation5 + $0x7c8] sm:$0xff]
    %v333 = vld [vmem:[#allocation5 + $0x7d0] sm:$0xff]
    %v334 = vld [vmem:[#allocation5 + $0x7d8] sm:$0xff]
    %v335 = vld [vmem:[#allocation5 + $0x7e0] sm:$0xff]
    %v336 = vld [vmem:[#allocation5 + $0x7e8] sm:$0xff]
    %v337 = vld [vmem:[#allocation5 + $0x7f0] sm:$0xff]
    %v338 = vld [vmem:[#allocation5 + $0x7f8] sm:$0xff]
    %v339 = vld [vmem:[#allocation7] sm:$0xff]
    %v341 = vlaneseq
    %v342 = vshrl.u32 %v341, 7
    %v343 = vsub.s32 0, %v342
    %v344 = vrot.slane %v339, %v343
    %v345 = vlaneseq
    %v346 = vshrl.u32 %v345, 7
    %v347 = vsub.s32 1, %v346
    %v348 = vrot.slane %v339, %v347
    %v349 = vlaneseq
    %v350 = vshrl.u32 %v349, 7
    %v351 = vsub.s32 2, %v350
    %v352 = vrot.slane %v339, %v351
    %v353 = vlaneseq
    %v354 = vshrl.u32 %v353, 7
    %v355 = vsub.s32 3, %v354
    %v356 = vrot.slane %v339, %v355
    %v357 = vlaneseq
    %v358 = vshrl.u32 %v357, 7
    %v359 = vsub.s32 4, %v358
    %v360 = vrot.slane %v339, %v359
    %v361 = vlaneseq
    %v362 = vshrl.u32 %v361, 7
    %v363 = vsub.s32 5, %v362
    %v364 = vrot.slane %v339, %v363
    %v365 = vlaneseq
    %v366 = vshrl.u32 %v365, 7
    %v367 = vsub.s32 6, %v366
    %v368 = vrot.slane %v339, %v367
    %v369 = vlaneseq
    %v370 = vshrl.u32 %v369, 7
    %v371 = vsub.s32 7, %v370
    %v372 = vrot.slane %v339, %v371
    %v389 = vunpack.c.l.b16 %v75
    %v390 = vunpack.c.h.b16 %v75
    %v391 = vunpack.c.l.b16 %v76
    %v392 = vunpack.c.h.b16 %v76
    %v393 = vunpack.c.l.b16 %v77
    %v394 = vunpack.c.h.b16 %v77
    %v395 = vunpack.c.l.b16 %v78
    %v396 = vunpack.c.h.b16 %v78
    %v397 = vunpack.c.l.b16 %v79
    %v398 = vunpack.c.h.b16 %v79
    %v399 = vunpack.c.l.b16 %v80
    %v400 = vunpack.c.h.b16 %v80
    %v401 = vunpack.c.l.b16 %v81
    %v402 = vunpack.c.h.b16 %v81
    %v403 = vunpack.c.l.b16 %v82
    %v404 = vunpack.c.h.b16 %v82
    %v405 = vpack.c.b16 %v393, %v389
    %v406 = vpack.c.b16 %v394, %v390
    %v407 = vpack.c.b16 %v395, %v391
    %v408 = vpack.c.b16 %v396, %v392
    %v409 = vpack.c.b16 %v401, %v397
    %v410 = vpack.c.b16 %v402, %v398
    %v411 = vpack.c.b16 %v403, %v399
    %v412 = vpack.c.b16 %v404, %v400
    %v677 = vunpack.c.l.b16 %v83
    %v678 = vunpack.c.h.b16 %v83
    %v679 = vunpack.c.l.b16 %v84
    %v680 = vunpack.c.h.b16 %v84
    %v681 = vunpack.c.l.b16 %v85
    %v682 = vunpack.c.h.b16 %v85
    %v683 = vunpack.c.l.b16 %v86
    %v684 = vunpack.c.h.b16 %v86
    %v685 = vunpack.c.l.b16 %v87
    %v686 = vunpack.c.h.b16 %v87
    %v687 = vunpack.c.l.b16 %v88
    %v688 = vunpack.c.h.b16 %v88
    %v689 = vunpack.c.l.b16 %v89
    %v690 = vunpack.c.h.b16 %v89
    %v691 = vunpack.c.l.b16 %v90
    %v692 = vunpack.c.h.b16 %v90
    %v693 = vunpack.c.l.b16 %v91
    %v694 = vunpack.c.h.b16 %v91
    %v695 = vunpack.c.l.b16 %v92
    %v696 = vunpack.c.h.b16 %v92
    %v697 = vunpack.c.l.b16 %v93
    %v698 = vunpack.c.h.b16 %v93
    %v699 = vunpack.c.l.b16 %v94
    %v700 = vunpack.c.h.b16 %v94
    %v701 = vunpack.c.l.b16 %v95
    %v702 = vunpack.c.h.b16 %v95
    %v703 = vunpack.c.l.b16 %v96
    %v704 = vunpack.c.h.b16 %v96
    %v705 = vunpack.c.l.b16 %v97
    %v706 = vunpack.c.h.b16 %v97
    %v707 = vunpack.c.l.b16 %v98
    %v708 = vunpack.c.h.b16 %v98
    %v709 = vunpack.c.l.b16 %v99
    %v710 = vunpack.c.h.b16 %v99
    %v711 = vunpack.c.l.b16 %v100
    %v712 = vunpack.c.h.b16 %v100
    %v713 = vunpack.c.l.b16 %v101
    %v714 = vunpack.c.h.b16 %v101
    %v715 = vunpack.c.l.b16 %v102
    %v716 = vunpack.c.h.b16 %v102
    %v717 = vunpack.c.l.b16 %v103
    %v718 = vunpack.c.h.b16 %v103
    %v719 = vunpack.c.l.b16 %v104
    %v720 = vunpack.c.h.b16 %v104
    %v721 = vunpack.c.l.b16 %v105
    %v722 = vunpack.c.h.b16 %v105
    %v723 = vunpack.c.l.b16 %v106
    %v724 = vunpack.c.h.b16 %v106
    %v725 = vunpack.c.l.b16 %v107
    %v726 = vunpack.c.h.b16 %v107
    %v727 = vunpack.c.l.b16 %v108
    %v728 = vunpack.c.h.b16 %v108
    %v729 = vunpack.c.l.b16 %v109
    %v730 = vunpack.c.h.b16 %v109
    %v731 = vunpack.c.l.b16 %v110
    %v732 = vunpack.c.h.b16 %v110
    %v733 = vunpack.c.l.b16 %v111
    %v734 = vunpack.c.h.b16 %v111
    %v735 = vunpack.c.l.b16 %v112
    %v736 = vunpack.c.h.b16 %v112
    %v737 = vunpack.c.l.b16 %v113
    %v738 = vunpack.c.h.b16 %v113
    %v739 = vunpack.c.l.b16 %v114
    %v740 = vunpack.c.h.b16 %v114
    %v741 = vunpack.c.l.b16 %v115
    %v742 = vunpack.c.h.b16 %v115
    %v743 = vunpack.c.l.b16 %v116
    %v744 = vunpack.c.h.b16 %v116
    %v745 = vunpack.c.l.b16 %v117
    %v746 = vunpack.c.h.b16 %v117
    %v747 = vunpack.c.l.b16 %v118
    %v748 = vunpack.c.h.b16 %v118
    %v749 = vunpack.c.l.b16 %v119
    %v750 = vunpack.c.h.b16 %v119
    %v751 = vunpack.c.l.b16 %v120
    %v752 = vunpack.c.h.b16 %v120
    %v753 = vunpack.c.l.b16 %v121
    %v754 = vunpack.c.h.b16 %v121
    %v755 = vunpack.c.l.b16 %v122
    %v756 = vunpack.c.h.b16 %v122
    %v757 = vunpack.c.l.b16 %v123
    %v758 = vunpack.c.h.b16 %v123
    %v759 = vunpack.c.l.b16 %v124
    %v760 = vunpack.c.h.b16 %v124
    %v761 = vunpack.c.l.b16 %v125
    %v762 = vunpack.c.h.b16 %v125
    %v763 = vunpack.c.l.b16 %v126
    %v764 = vunpack.c.h.b16 %v126
    %v765 = vunpack.c.l.b16 %v127
    %v766 = vunpack.c.h.b16 %v127
    %v767 = vunpack.c.l.b16 %v128
    %v768 = vunpack.c.h.b16 %v128
    %v769 = vunpack.c.l.b16 %v129
    %v770 = vunpack.c.h.b16 %v129
    %v771 = vunpack.c.l.b16 %v130
    %v772 = vunpack.c.h.b16 %v130
    %v773 = vunpack.c.l.b16 %v131
    %v774 = vunpack.c.h.b16 %v131
    %v775 = vunpack.c.l.b16 %v132
    %v776 = vunpack.c.h.b16 %v132
    %v777 = vunpack.c.l.b16 %v133
    %v778 = vunpack.c.h.b16 %v133
    %v779 = vunpack.c.l.b16 %v134
    %v780 = vunpack.c.h.b16 %v134
    %v781 = vunpack.c.l.b16 %v135
    %v782 = vunpack.c.h.b16 %v135
    %v783 = vunpack.c.l.b16 %v136
    %v784 = vunpack.c.h.b16 %v136
    %v785 = vunpack.c.l.b16 %v137
    %v786 = vunpack.c.h.b16 %v137
    %v787 = vunpack.c.l.b16 %v138
    %v788 = vunpack.c.h.b16 %v138
    %v789 = vunpack.c.l.b16 %v139
    %v790 = vunpack.c.h.b16 %v139
    %v791 = vunpack.c.l.b16 %v140
    %v792 = vunpack.c.h.b16 %v140
    %v793 = vunpack.c.l.b16 %v141
    %v794 = vunpack.c.h.b16 %v141
    %v795 = vunpack.c.l.b16 %v142
    %v796 = vunpack.c.h.b16 %v142
    %v797 = vunpack.c.l.b16 %v143
    %v798 = vunpack.c.h.b16 %v143
    %v799 = vunpack.c.l.b16 %v144
    %v800 = vunpack.c.h.b16 %v144
    %v801 = vunpack.c.l.b16 %v145
    %v802 = vunpack.c.h.b16 %v145
    %v803 = vunpack.c.l.b16 %v146
    %v804 = vunpack.c.h.b16 %v146
    %v805 = vunpack.c.l.b16 %v147
    %v806 = vunpack.c.h.b16 %v147
    %v807 = vunpack.c.l.b16 %v148
    %v808 = vunpack.c.h.b16 %v148
    %v809 = vunpack.c.l.b16 %v149
    %v810 = vunpack.c.h.b16 %v149
    %v811 = vunpack.c.l.b16 %v150
    %v812 = vunpack.c.h.b16 %v150
    %v813 = vunpack.c.l.b16 %v151
    %v814 = vunpack.c.h.b16 %v151
    %v815 = vunpack.c.l.b16 %v152
    %v816 = vunpack.c.h.b16 %v152
    %v817 = vunpack.c.l.b16 %v153
    %v818 = vunpack.c.h.b16 %v153
    %v819 = vunpack.c.l.b16 %v154
    %v820 = vunpack.c.h.b16 %v154
    %v821 = vunpack.c.l.b16 %v155
    %v822 = vunpack.c.h.b16 %v155
    %v823 = vunpack.c.l.b16 %v156
    %v824 = vunpack.c.h.b16 %v156
    %v825 = vunpack.c.l.b16 %v157
    %v826 = vunpack.c.h.b16 %v157
    %v827 = vunpack.c.l.b16 %v158
    %v828 = vunpack.c.h.b16 %v158
    %v829 = vunpack.c.l.b16 %v159
    %v830 = vunpack.c.h.b16 %v159
    %v831 = vunpack.c.l.b16 %v160
    %v832 = vunpack.c.h.b16 %v160
    %v833 = vunpack.c.l.b16 %v161
    %v834 = vunpack.c.h.b16 %v161
    %v835 = vunpack.c.l.b16 %v162
    %v836 = vunpack.c.h.b16 %v162
    %v837 = vunpack.c.l.b16 %v163
    %v838 = vunpack.c.h.b16 %v163
    %v839 = vunpack.c.l.b16 %v164
    %v840 = vunpack.c.h.b16 %v164
    %v841 = vunpack.c.l.b16 %v165
    %v842 = vunpack.c.h.b16 %v165
    %v843 = vunpack.c.l.b16 %v166
    %v844 = vunpack.c.h.b16 %v166
    %v845 = vunpack.c.l.b16 %v167
    %v846 = vunpack.c.h.b16 %v167
    %v847 = vunpack.c.l.b16 %v168
    %v848 = vunpack.c.h.b16 %v168
    %v849 = vunpack.c.l.b16 %v169
    %v850 = vunpack.c.h.b16 %v169
    %v851 = vunpack.c.l.b16 %v170
    %v852 = vunpack.c.h.b16 %v170
    %v853 = vunpack.c.l.b16 %v171
    %v854 = vunpack.c.h.b16 %v171
    %v855 = vunpack.c.l.b16 %v172
    %v856 = vunpack.c.h.b16 %v172
    %v857 = vunpack.c.l.b16 %v173
    %v858 = vunpack.c.h.b16 %v173
    %v859 = vunpack.c.l.b16 %v174
    %v860 = vunpack.c.h.b16 %v174
    %v861 = vunpack.c.l.b16 %v175
    %v862 = vunpack.c.h.b16 %v175
    %v863 = vunpack.c.l.b16 %v176
    %v864 = vunpack.c.h.b16 %v176
    %v865 = vunpack.c.l.b16 %v177
    %v866 = vunpack.c.h.b16 %v177
    %v867 = vunpack.c.l.b16 %v178
    %v868 = vunpack.c.h.b16 %v178
    %v869 = vunpack.c.l.b16 %v179
    %v870 = vunpack.c.h.b16 %v179
    %v871 = vunpack.c.l.b16 %v180
    %v872 = vunpack.c.h.b16 %v180
    %v873 = vunpack.c.l.b16 %v181
    %v874 = vunpack.c.h.b16 %v181
    %v875 = vunpack.c.l.b16 %v182
    %v876 = vunpack.c.h.b16 %v182
    %v877 = vunpack.c.l.b16 %v183
    %v878 = vunpack.c.h.b16 %v183
    %v879 = vunpack.c.l.b16 %v184
    %v880 = vunpack.c.h.b16 %v184
    %v881 = vunpack.c.l.b16 %v185
    %v882 = vunpack.c.h.b16 %v185
    %v883 = vunpack.c.l.b16 %v186
    %v884 = vunpack.c.h.b16 %v186
    %v885 = vunpack.c.l.b16 %v187
    %v886 = vunpack.c.h.b16 %v187
    %v887 = vunpack.c.l.b16 %v188
    %v888 = vunpack.c.h.b16 %v188
    %v889 = vunpack.c.l.b16 %v189
    %v890 = vunpack.c.h.b16 %v189
    %v891 = vunpack.c.l.b16 %v190
    %v892 = vunpack.c.h.b16 %v190
    %v893 = vunpack.c.l.b16 %v191
    %v894 = vunpack.c.h.b16 %v191
    %v895 = vunpack.c.l.b16 %v192
    %v896 = vunpack.c.h.b16 %v192
    %v897 = vunpack.c.l.b16 %v193
    %v898 = vunpack.c.h.b16 %v193
    %v899 = vunpack.c.l.b16 %v194
    %v900 = vunpack.c.h.b16 %v194
    %v901 = vunpack.c.l.b16 %v195
    %v902 = vunpack.c.h.b16 %v195
    %v903 = vunpack.c.l.b16 %v196
    %v904 = vunpack.c.h.b16 %v196
    %v905 = vunpack.c.l.b16 %v197
    %v906 = vunpack.c.h.b16 %v197
    %v907 = vunpack.c.l.b16 %v198
    %v908 = vunpack.c.h.b16 %v198
    %v909 = vunpack.c.l.b16 %v199
    %v910 = vunpack.c.h.b16 %v199
    %v911 = vunpack.c.l.b16 %v200
    %v912 = vunpack.c.h.b16 %v200
    %v913 = vunpack.c.l.b16 %v201
    %v914 = vunpack.c.h.b16 %v201
    %v915 = vunpack.c.l.b16 %v202
    %v916 = vunpack.c.h.b16 %v202
    %v917 = vunpack.c.l.b16 %v203
    %v918 = vunpack.c.h.b16 %v203
    %v919 = vunpack.c.l.b16 %v204
    %v920 = vunpack.c.h.b16 %v204
    %v921 = vunpack.c.l.b16 %v205
    %v922 = vunpack.c.h.b16 %v205
    %v923 = vunpack.c.l.b16 %v206
    %v924 = vunpack.c.h.b16 %v206
    %v925 = vunpack.c.l.b16 %v207
    %v926 = vunpack.c.h.b16 %v207
    %v927 = vunpack.c.l.b16 %v208
    %v928 = vunpack.c.h.b16 %v208
    %v929 = vunpack.c.l.b16 %v209
    %v930 = vunpack.c.h.b16 %v209
    %v931 = vunpack.c.l.b16 %v210
    %v932 = vunpack.c.h.b16 %v210
    %v933 = vunpack.c.l.b16 %v211
    %v934 = vunpack.c.h.b16 %v211
    %v935 = vunpack.c.l.b16 %v212
    %v936 = vunpack.c.h.b16 %v212
    %v937 = vunpack.c.l.b16 %v213
    %v938 = vunpack.c.h.b16 %v213
    %v939 = vunpack.c.l.b16 %v214
    %v940 = vunpack.c.h.b16 %v214
    %v941 = vunpack.c.l.b16 %v215
    %v942 = vunpack.c.h.b16 %v215
    %v943 = vunpack.c.l.b16 %v216
    %v944 = vunpack.c.h.b16 %v216
    %v945 = vunpack.c.l.b16 %v217
    %v946 = vunpack.c.h.b16 %v217
    %v947 = vunpack.c.l.b16 %v218
    %v948 = vunpack.c.h.b16 %v218
    %v949 = vunpack.c.l.b16 %v219
    %v950 = vunpack.c.h.b16 %v219
    %v951 = vunpack.c.l.b16 %v220
    %v952 = vunpack.c.h.b16 %v220
    %v953 = vunpack.c.l.b16 %v221
    %v954 = vunpack.c.h.b16 %v221
    %v955 = vunpack.c.l.b16 %v222
    %v956 = vunpack.c.h.b16 %v222
    %v957 = vunpack.c.l.b16 %v223
    %v958 = vunpack.c.h.b16 %v223
    %v959 = vunpack.c.l.b16 %v224
    %v960 = vunpack.c.h.b16 %v224
    %v961 = vunpack.c.l.b16 %v225
    %v962 = vunpack.c.h.b16 %v225
    %v963 = vunpack.c.l.b16 %v226
    %v964 = vunpack.c.h.b16 %v226
    %v965 = vunpack.c.l.b16 %v227
    %v966 = vunpack.c.h.b16 %v227
    %v967 = vunpack.c.l.b16 %v228
    %v968 = vunpack.c.h.b16 %v228
    %v969 = vunpack.c.l.b16 %v229
    %v970 = vunpack.c.h.b16 %v229
    %v971 = vunpack.c.l.b16 %v230
    %v972 = vunpack.c.h.b16 %v230
    %v973 = vunpack.c.l.b16 %v231
    %v974 = vunpack.c.h.b16 %v231
    %v975 = vunpack.c.l.b16 %v232
    %v976 = vunpack.c.h.b16 %v232
    %v977 = vunpack.c.l.b16 %v233
    %v978 = vunpack.c.h.b16 %v233
    %v979 = vunpack.c.l.b16 %v234
    %v980 = vunpack.c.h.b16 %v234
    %v981 = vunpack.c.l.b16 %v235
    %v982 = vunpack.c.h.b16 %v235
    %v983 = vunpack.c.l.b16 %v236
    %v984 = vunpack.c.h.b16 %v236
    %v985 = vunpack.c.l.b16 %v237
    %v986 = vunpack.c.h.b16 %v237
    %v987 = vunpack.c.l.b16 %v238
    %v988 = vunpack.c.h.b16 %v238
    %v989 = vunpack.c.l.b16 %v239
    %v990 = vunpack.c.h.b16 %v239
    %v991 = vunpack.c.l.b16 %v240
    %v992 = vunpack.c.h.b16 %v240
    %v993 = vunpack.c.l.b16 %v241
    %v994 = vunpack.c.h.b16 %v241
    %v995 = vunpack.c.l.b16 %v242
    %v996 = vunpack.c.h.b16 %v242
    %v997 = vunpack.c.l.b16 %v243
    %v998 = vunpack.c.h.b16 %v243
    %v999 = vunpack.c.l.b16 %v244
    %v1000 = vunpack.c.h.b16 %v244
    %v1001 = vunpack.c.l.b16 %v245
    %v1002 = vunpack.c.h.b16 %v245
    %v1003 = vunpack.c.l.b16 %v246
    %v1004 = vunpack.c.h.b16 %v246
    %v1005 = vunpack.c.l.b16 %v247
    %v1006 = vunpack.c.h.b16 %v247
    %v1007 = vunpack.c.l.b16 %v248
    %v1008 = vunpack.c.h.b16 %v248
    %v1009 = vunpack.c.l.b16 %v249
    %v1010 = vunpack.c.h.b16 %v249
    %v1011 = vunpack.c.l.b16 %v250
    %v1012 = vunpack.c.h.b16 %v250
    %v1013 = vunpack.c.l.b16 %v251
    %v1014 = vunpack.c.h.b16 %v251
    %v1015 = vunpack.c.l.b16 %v252
    %v1016 = vunpack.c.h.b16 %v252
    %v1017 = vunpack.c.l.b16 %v253
    %v1018 = vunpack.c.h.b16 %v253
    %v1019 = vunpack.c.l.b16 %v254
    %v1020 = vunpack.c.h.b16 %v254
    %v1021 = vunpack.c.l.b16 %v255
    %v1022 = vunpack.c.h.b16 %v255
    %v1023 = vunpack.c.l.b16 %v256
    %v1024 = vunpack.c.h.b16 %v256
    %v1025 = vunpack.c.l.b16 %v257
    %v1026 = vunpack.c.h.b16 %v257
    %v1027 = vunpack.c.l.b16 %v258
    %v1028 = vunpack.c.h.b16 %v258
    %v1029 = vunpack.c.l.b16 %v259
    %v1030 = vunpack.c.h.b16 %v259
    %v1031 = vunpack.c.l.b16 %v260
    %v1032 = vunpack.c.h.b16 %v260
    %v1033 = vunpack.c.l.b16 %v261
    %v1034 = vunpack.c.h.b16 %v261
    %v1035 = vunpack.c.l.b16 %v262
    %v1036 = vunpack.c.h.b16 %v262
    %v1037 = vunpack.c.l.b16 %v263
    %v1038 = vunpack.c.h.b16 %v263
    %v1039 = vunpack.c.l.b16 %v264
    %v1040 = vunpack.c.h.b16 %v264
    %v1041 = vunpack.c.l.b16 %v265
    %v1042 = vunpack.c.h.b16 %v265
    %v1043 = vunpack.c.l.b16 %v266
    %v1044 = vunpack.c.h.b16 %v266
    %v1045 = vunpack.c.l.b16 %v267
    %v1046 = vunpack.c.h.b16 %v267
    %v1047 = vunpack.c.l.b16 %v268
    %v1048 = vunpack.c.h.b16 %v268
    %v1049 = vunpack.c.l.b16 %v269
    %v1050 = vunpack.c.h.b16 %v269
    %v1051 = vunpack.c.l.b16 %v270
    %v1052 = vunpack.c.h.b16 %v270
    %v1053 = vunpack.c.l.b16 %v271
    %v1054 = vunpack.c.h.b16 %v271
    %v1055 = vunpack.c.l.b16 %v272
    %v1056 = vunpack.c.h.b16 %v272
    %v1057 = vunpack.c.l.b16 %v273
    %v1058 = vunpack.c.h.b16 %v273
    %v1059 = vunpack.c.l.b16 %v274
    %v1060 = vunpack.c.h.b16 %v274
    %v1061 = vunpack.c.l.b16 %v275
    %v1062 = vunpack.c.h.b16 %v275
    %v1063 = vunpack.c.l.b16 %v276
    %v1064 = vunpack.c.h.b16 %v276
    %v1065 = vunpack.c.l.b16 %v277
    %v1066 = vunpack.c.h.b16 %v277
    %v1067 = vunpack.c.l.b16 %v278
    %v1068 = vunpack.c.h.b16 %v278
    %v1069 = vunpack.c.l.b16 %v279
    %v1070 = vunpack.c.h.b16 %v279
    %v1071 = vunpack.c.l.b16 %v280
    %v1072 = vunpack.c.h.b16 %v280
    %v1073 = vunpack.c.l.b16 %v281
    %v1074 = vunpack.c.h.b16 %v281
    %v1075 = vunpack.c.l.b16 %v282
    %v1076 = vunpack.c.h.b16 %v282
    %v1077 = vunpack.c.l.b16 %v283
    %v1078 = vunpack.c.h.b16 %v283
    %v1079 = vunpack.c.l.b16 %v284
    %v1080 = vunpack.c.h.b16 %v284
    %v1081 = vunpack.c.l.b16 %v285
    %v1082 = vunpack.c.h.b16 %v285
    %v1083 = vunpack.c.l.b16 %v286
    %v1084 = vunpack.c.h.b16 %v286
    %v1085 = vunpack.c.l.b16 %v287
    %v1086 = vunpack.c.h.b16 %v287
    %v1087 = vunpack.c.l.b16 %v288
    %v1088 = vunpack.c.h.b16 %v288
    %v1089 = vunpack.c.l.b16 %v289
    %v1090 = vunpack.c.h.b16 %v289
    %v1091 = vunpack.c.l.b16 %v290
    %v1092 = vunpack.c.h.b16 %v290
    %v1093 = vunpack.c.l.b16 %v291
    %v1094 = vunpack.c.h.b16 %v291
    %v1095 = vunpack.c.l.b16 %v292
    %v1096 = vunpack.c.h.b16 %v292
    %v1097 = vunpack.c.l.b16 %v293
    %v1098 = vunpack.c.h.b16 %v293
    %v1099 = vunpack.c.l.b16 %v294
    %v1100 = vunpack.c.h.b16 %v294
    %v1101 = vunpack.c.l.b16 %v295
    %v1102 = vunpack.c.h.b16 %v295
    %v1103 = vunpack.c.l.b16 %v296
    %v1104 = vunpack.c.h.b16 %v296
    %v1105 = vunpack.c.l.b16 %v297
    %v1106 = vunpack.c.h.b16 %v297
    %v1107 = vunpack.c.l.b16 %v298
    %v1108 = vunpack.c.h.b16 %v298
    %v1109 = vunpack.c.l.b16 %v299
    %v1110 = vunpack.c.h.b16 %v299
    %v1111 = vunpack.c.l.b16 %v300
    %v1112 = vunpack.c.h.b16 %v300
    %v1113 = vunpack.c.l.b16 %v301
    %v1114 = vunpack.c.h.b16 %v301
    %v1115 = vunpack.c.l.b16 %v302
    %v1116 = vunpack.c.h.b16 %v302
    %v1117 = vunpack.c.l.b16 %v303
    %v1118 = vunpack.c.h.b16 %v303
    %v1119 = vunpack.c.l.b16 %v304
    %v1120 = vunpack.c.h.b16 %v304
    %v1121 = vunpack.c.l.b16 %v305
    %v1122 = vunpack.c.h.b16 %v305
    %v1123 = vunpack.c.l.b16 %v306
    %v1124 = vunpack.c.h.b16 %v306
    %v1125 = vunpack.c.l.b16 %v307
    %v1126 = vunpack.c.h.b16 %v307
    %v1127 = vunpack.c.l.b16 %v308
    %v1128 = vunpack.c.h.b16 %v308
    %v1129 = vunpack.c.l.b16 %v309
    %v1130 = vunpack.c.h.b16 %v309
    %v1131 = vunpack.c.l.b16 %v310
    %v1132 = vunpack.c.h.b16 %v310
    %v1133 = vunpack.c.l.b16 %v311
    %v1134 = vunpack.c.h.b16 %v311
    %v1135 = vunpack.c.l.b16 %v312
    %v1136 = vunpack.c.h.b16 %v312
    %v1137 = vunpack.c.l.b16 %v313
    %v1138 = vunpack.c.h.b16 %v313
    %v1139 = vunpack.c.l.b16 %v314
    %v1140 = vunpack.c.h.b16 %v314
    %v1141 = vunpack.c.l.b16 %v315
    %v1142 = vunpack.c.h.b16 %v315
    %v1143 = vunpack.c.l.b16 %v316
    %v1144 = vunpack.c.h.b16 %v316
    %v1145 = vunpack.c.l.b16 %v317
    %v1146 = vunpack.c.h.b16 %v317
    %v1147 = vunpack.c.l.b16 %v318
    %v1148 = vunpack.c.h.b16 %v318
    %v1149 = vunpack.c.l.b16 %v319
    %v1150 = vunpack.c.h.b16 %v319
    %v1151 = vunpack.c.l.b16 %v320
    %v1152 = vunpack.c.h.b16 %v320
    %v1153 = vunpack.c.l.b16 %v321
    %v1154 = vunpack.c.h.b16 %v321
    %v1155 = vunpack.c.l.b16 %v322
    %v1156 = vunpack.c.h.b16 %v322
    %v1157 = vunpack.c.l.b16 %v323
    %v1158 = vunpack.c.h.b16 %v323
    %v1159 = vunpack.c.l.b16 %v324
    %v1160 = vunpack.c.h.b16 %v324
    %v1161 = vunpack.c.l.b16 %v325
    %v1162 = vunpack.c.h.b16 %v325
    %v1163 = vunpack.c.l.b16 %v326
    %v1164 = vunpack.c.h.b16 %v326
    %v1165 = vunpack.c.l.b16 %v327
    %v1166 = vunpack.c.h.b16 %v327
    %v1167 = vunpack.c.l.b16 %v328
    %v1168 = vunpack.c.h.b16 %v328
    %v1169 = vunpack.c.l.b16 %v329
    %v1170 = vunpack.c.h.b16 %v329
    %v1171 = vunpack.c.l.b16 %v330
    %v1172 = vunpack.c.h.b16 %v330
    %v1173 = vunpack.c.l.b16 %v331
    %v1174 = vunpack.c.h.b16 %v331
    %v1175 = vunpack.c.l.b16 %v332
    %v1176 = vunpack.c.h.b16 %v332
    %v1177 = vunpack.c.l.b16 %v333
    %v1178 = vunpack.c.h.b16 %v333
    %v1179 = vunpack.c.l.b16 %v334
    %v1180 = vunpack.c.h.b16 %v334
    %v1181 = vunpack.c.l.b16 %v335
    %v1182 = vunpack.c.h.b16 %v335
    %v1183 = vunpack.c.l.b16 %v336
    %v1184 = vunpack.c.h.b16 %v336
    %v1185 = vunpack.c.l.b16 %v337
    %v1186 = vunpack.c.h.b16 %v337
    %v1187 = vunpack.c.l.b16 %v338
    %v1188 = vunpack.c.h.b16 %v338
    %v1189 = vpack.c.b16 %v685, %v677
    %v1190 = vpack.c.b16 %v686, %v678
    %v1191 = vpack.c.b16 %v687, %v679
    %v1192 = vpack.c.b16 %v688, %v680
    %v1193 = vpack.c.b16 %v689, %v681
    %v1194 = vpack.c.b16 %v690, %v682
    %v1195 = vpack.c.b16 %v691, %v683
    %v1196 = vpack.c.b16 %v692, %v684
    %v1197 = vpack.c.b16 %v701, %v693
    %v1198 = vpack.c.b16 %v702, %v694
    %v1199 = vpack.c.b16 %v703, %v695
    %v1200 = vpack.c.b16 %v704, %v696
    %v1201 = vpack.c.b16 %v705, %v697
    %v1202 = vpack.c.b16 %v706, %v698
    %v1203 = vpack.c.b16 %v707, %v699
    %v1204 = vpack.c.b16 %v708, %v700
    %v1205 = vpack.c.b16 %v717, %v709
    %v1206 = vpack.c.b16 %v718, %v710
    %v1207 = vpack.c.b16 %v719, %v711
    %v1208 = vpack.c.b16 %v720, %v712
    %v1209 = vpack.c.b16 %v721, %v713
    %v1210 = vpack.c.b16 %v722, %v714
    %v1211 = vpack.c.b16 %v723, %v715
    %v1212 = vpack.c.b16 %v724, %v716
    %v1213 = vpack.c.b16 %v733, %v725
    %v1214 = vpack.c.b16 %v734, %v726
    %v1215 = vpack.c.b16 %v735, %v727
    %v1216 = vpack.c.b16 %v736, %v728
    %v1217 = vpack.c.b16 %v737, %v729
    %v1218 = vpack.c.b16 %v738, %v730
    %v1219 = vpack.c.b16 %v739, %v731
    %v1220 = vpack.c.b16 %v740, %v732
    %v1221 = vpack.c.b16 %v749, %v741
    %v1222 = vpack.c.b16 %v750, %v742
    %v1223 = vpack.c.b16 %v751, %v743
    %v1224 = vpack.c.b16 %v752, %v744
    %v1225 = vpack.c.b16 %v753, %v745
    %v1226 = vpack.c.b16 %v754, %v746
    %v1227 = vpack.c.b16 %v755, %v747
    %v1228 = vpack.c.b16 %v756, %v748
    %v1229 = vpack.c.b16 %v765, %v757
    %v1230 = vpack.c.b16 %v766, %v758
    %v1231 = vpack.c.b16 %v767, %v759
    %v1232 = vpack.c.b16 %v768, %v760
    %v1233 = vpack.c.b16 %v769, %v761
    %v1234 = vpack.c.b16 %v770, %v762
    %v1235 = vpack.c.b16 %v771, %v763
    %v1236 = vpack.c.b16 %v772, %v764
    %v1237 = vpack.c.b16 %v781, %v773
    %v1238 = vpack.c.b16 %v782, %v774
    %v1239 = vpack.c.b16 %v783, %v775
    %v1240 = vpack.c.b16 %v784, %v776
    %v1241 = vpack.c.b16 %v785, %v777
    %v1242 = vpack.c.b16 %v786, %v778
    %v1243 = vpack.c.b16 %v787, %v779
    %v1244 = vpack.c.b16 %v788, %v780
    %v1245 = vpack.c.b16 %v797, %v789
    %v1246 = vpack.c.b16 %v798, %v790
    %v1247 = vpack.c.b16 %v799, %v791
    %v1248 = vpack.c.b16 %v800, %v792
    %v1249 = vpack.c.b16 %v801, %v793
    %v1250 = vpack.c.b16 %v802, %v794
    %v1251 = vpack.c.b16 %v803, %v795
    %v1252 = vpack.c.b16 %v804, %v796
    %v1253 = vpack.c.b16 %v813, %v805
    %v1254 = vpack.c.b16 %v814, %v806
    %v1255 = vpack.c.b16 %v815, %v807
    %v1256 = vpack.c.b16 %v816, %v808
    %v1257 = vpack.c.b16 %v817, %v809
    %v1258 = vpack.c.b16 %v818, %v810
    %v1259 = vpack.c.b16 %v819, %v811
    %v1260 = vpack.c.b16 %v820, %v812
    %v1261 = vpack.c.b16 %v829, %v821
    %v1262 = vpack.c.b16 %v830, %v822
    %v1263 = vpack.c.b16 %v831, %v823
    %v1264 = vpack.c.b16 %v832, %v824
    %v1265 = vpack.c.b16 %v833, %v825
    %v1266 = vpack.c.b16 %v834, %v826
    %v1267 = vpack.c.b16 %v835, %v827
    %v1268 = vpack.c.b16 %v836, %v828
    %v1269 = vpack.c.b16 %v845, %v837
    %v1270 = vpack.c.b16 %v846, %v838
    %v1271 = vpack.c.b16 %v847, %v839
    %v1272 = vpack.c.b16 %v848, %v840
    %v1273 = vpack.c.b16 %v849, %v841
    %v1274 = vpack.c.b16 %v850, %v842
    %v1275 = vpack.c.b16 %v851, %v843
    %v1276 = vpack.c.b16 %v852, %v844
    %v1277 = vpack.c.b16 %v861, %v853
    %v1278 = vpack.c.b16 %v862, %v854
    %v1279 = vpack.c.b16 %v863, %v855
    %v1280 = vpack.c.b16 %v864, %v856
    %v1281 = vpack.c.b16 %v865, %v857
    %v1282 = vpack.c.b16 %v866, %v858
    %v1283 = vpack.c.b16 %v867, %v859
    %v1284 = vpack.c.b16 %v868, %v860
    %v1285 = vpack.c.b16 %v877, %v869
    %v1286 = vpack.c.b16 %v878, %v870
    %v1287 = vpack.c.b16 %v879, %v871
    %v1288 = vpack.c.b16 %v880, %v872
    %v1289 = vpack.c.b16 %v881, %v873
    %v1290 = vpack.c.b16 %v882, %v874
    %v1291 = vpack.c.b16 %v883, %v875
    %v1292 = vpack.c.b16 %v884, %v876
    %v1293 = vpack.c.b16 %v893, %v885
    %v1294 = vpack.c.b16 %v894, %v886
    %v1295 = vpack.c.b16 %v895, %v887
    %v1296 = vpack.c.b16 %v896, %v888
    %v1297 = vpack.c.b16 %v897, %v889
    %v1298 = vpack.c.b16 %v898, %v890
    %v1299 = vpack.c.b16 %v899, %v891
    %v1300 = vpack.c.b16 %v900, %v892
    %v1301 = vpack.c.b16 %v909, %v901
    %v1302 = vpack.c.b16 %v910, %v902
    %v1303 = vpack.c.b16 %v911, %v903
    %v1304 = vpack.c.b16 %v912, %v904
    %v1305 = vpack.c.b16 %v913, %v905
    %v1306 = vpack.c.b16 %v914, %v906
    %v1307 = vpack.c.b16 %v915, %v907
    %v1308 = vpack.c.b16 %v916, %v908
    %v1309 = vpack.c.b16 %v925, %v917
    %v1310 = vpack.c.b16 %v926, %v918
    %v1311 = vpack.c.b16 %v927, %v919
    %v1312 = vpack.c.b16 %v928, %v920
    %v1313 = vpack.c.b16 %v929, %v921
    %v1314 = vpack.c.b16 %v930, %v922
    %v1315 = vpack.c.b16 %v931, %v923
    %v1316 = vpack.c.b16 %v932, %v924
    %v1317 = vpack.c.b16 %v941, %v933
    %v1318 = vpack.c.b16 %v942, %v934
    %v1319 = vpack.c.b16 %v943, %v935
    %v1320 = vpack.c.b16 %v944, %v936
    %v1321 = vpack.c.b16 %v945, %v937
    %v1322 = vpack.c.b16 %v946, %v938
    %v1323 = vpack.c.b16 %v947, %v939
    %v1324 = vpack.c.b16 %v948, %v940
    %v1325 = vpack.c.b16 %v957, %v949
    %v1326 = vpack.c.b16 %v958, %v950
    %v1327 = vpack.c.b16 %v959, %v951
    %v1328 = vpack.c.b16 %v960, %v952
    %v1329 = vpack.c.b16 %v961, %v953
    %v1330 = vpack.c.b16 %v962, %v954
    %v1331 = vpack.c.b16 %v963, %v955
    %v1332 = vpack.c.b16 %v964, %v956
    %v1333 = vpack.c.b16 %v973, %v965
    %v1334 = vpack.c.b16 %v974, %v966
    %v1335 = vpack.c.b16 %v975, %v967
    %v1336 = vpack.c.b16 %v976, %v968
    %v1337 = vpack.c.b16 %v977, %v969
    %v1338 = vpack.c.b16 %v978, %v970
    %v1339 = vpack.c.b16 %v979, %v971
    %v1340 = vpack.c.b16 %v980, %v972
    %v1341 = vpack.c.b16 %v989, %v981
    %v1342 = vpack.c.b16 %v990, %v982
    %v1343 = vpack.c.b16 %v991, %v983
    %v1344 = vpack.c.b16 %v992, %v984
    %v1345 = vpack.c.b16 %v993, %v985
    %v1346 = vpack.c.b16 %v994, %v986
    %v1347 = vpack.c.b16 %v995, %v987
    %v1348 = vpack.c.b16 %v996, %v988
    %v1349 = vpack.c.b16 %v1005, %v997
    %v1350 = vpack.c.b16 %v1006, %v998
    %v1351 = vpack.c.b16 %v1007, %v999
    %v1352 = vpack.c.b16 %v1008, %v1000
    %v1353 = vpack.c.b16 %v1009, %v1001
    %v1354 = vpack.c.b16 %v1010, %v1002
    %v1355 = vpack.c.b16 %v1011, %v1003
    %v1356 = vpack.c.b16 %v1012, %v1004
    %v1357 = vpack.c.b16 %v1021, %v1013
    %v1358 = vpack.c.b16 %v1022, %v1014
    %v1359 = vpack.c.b16 %v1023, %v1015
    %v1360 = vpack.c.b16 %v1024, %v1016
    %v1361 = vpack.c.b16 %v1025, %v1017
    %v1362 = vpack.c.b16 %v1026, %v1018
    %v1363 = vpack.c.b16 %v1027, %v1019
    %v1364 = vpack.c.b16 %v1028, %v1020
    %v1365 = vpack.c.b16 %v1037, %v1029
    %v1366 = vpack.c.b16 %v1038, %v1030
    %v1367 = vpack.c.b16 %v1039, %v1031
    %v1368 = vpack.c.b16 %v1040, %v1032
    %v1369 = vpack.c.b16 %v1041, %v1033
    %v1370 = vpack.c.b16 %v1042, %v1034
    %v1371 = vpack.c.b16 %v1043, %v1035
    %v1372 = vpack.c.b16 %v1044, %v1036
    %v1373 = vpack.c.b16 %v1053, %v1045
    %v1374 = vpack.c.b16 %v1054, %v1046
    %v1375 = vpack.c.b16 %v1055, %v1047
    %v1376 = vpack.c.b16 %v1056, %v1048
    %v1377 = vpack.c.b16 %v1057, %v1049
    %v1378 = vpack.c.b16 %v1058, %v1050
    %v1379 = vpack.c.b16 %v1059, %v1051
    %v1380 = vpack.c.b16 %v1060, %v1052
    %v1381 = vpack.c.b16 %v1069, %v1061
    %v1382 = vpack.c.b16 %v1070, %v1062
    %v1383 = vpack.c.b16 %v1071, %v1063
    %v1384 = vpack.c.b16 %v1072, %v1064
    %v1385 = vpack.c.b16 %v1073, %v1065
    %v1386 = vpack.c.b16 %v1074, %v1066
    %v1387 = vpack.c.b16 %v1075, %v1067
    %v1388 = vpack.c.b16 %v1076, %v1068
    %v1389 = vpack.c.b16 %v1085, %v1077
    %v1390 = vpack.c.b16 %v1086, %v1078
    %v1391 = vpack.c.b16 %v1087, %v1079
    %v1392 = vpack.c.b16 %v1088, %v1080
    %v1393 = vpack.c.b16 %v1089, %v1081
    %v1394 = vpack.c.b16 %v1090, %v1082
    %v1395 = vpack.c.b16 %v1091, %v1083
    %v1396 = vpack.c.b16 %v1092, %v1084
    %v1397 = vpack.c.b16 %v1101, %v1093
    %v1398 = vpack.c.b16 %v1102, %v1094
    %v1399 = vpack.c.b16 %v1103, %v1095
    %v1400 = vpack.c.b16 %v1104, %v1096
    %v1401 = vpack.c.b16 %v1105, %v1097
    %v1402 = vpack.c.b16 %v1106, %v1098
    %v1403 = vpack.c.b16 %v1107, %v1099
    %v1404 = vpack.c.b16 %v1108, %v1100
    %v1405 = vpack.c.b16 %v1117, %v1109
    %v1406 = vpack.c.b16 %v1118, %v1110
    %v1407 = vpack.c.b16 %v1119, %v1111
    %v1408 = vpack.c.b16 %v1120, %v1112
    %v1409 = vpack.c.b16 %v1121, %v1113
    %v1410 = vpack.c.b16 %v1122, %v1114
    %v1411 = vpack.c.b16 %v1123, %v1115
    %v1412 = vpack.c.b16 %v1124, %v1116
    %v1413 = vpack.c.b16 %v1133, %v1125
    %v1414 = vpack.c.b16 %v1134, %v1126
    %v1415 = vpack.c.b16 %v1135, %v1127
    %v1416 = vpack.c.b16 %v1136, %v1128
    %v1417 = vpack.c.b16 %v1137, %v1129
    %v1418 = vpack.c.b16 %v1138, %v1130
    %v1419 = vpack.c.b16 %v1139, %v1131
    %v1420 = vpack.c.b16 %v1140, %v1132
    %v1421 = vpack.c.b16 %v1149, %v1141
    %v1422 = vpack.c.b16 %v1150, %v1142
    %v1423 = vpack.c.b16 %v1151, %v1143
    %v1424 = vpack.c.b16 %v1152, %v1144
    %v1425 = vpack.c.b16 %v1153, %v1145
    %v1426 = vpack.c.b16 %v1154, %v1146
    %v1427 = vpack.c.b16 %v1155, %v1147
    %v1428 = vpack.c.b16 %v1156, %v1148
    %v1429 = vpack.c.b16 %v1165, %v1157
    %v1430 = vpack.c.b16 %v1166, %v1158
    %v1431 = vpack.c.b16 %v1167, %v1159
    %v1432 = vpack.c.b16 %v1168, %v1160
    %v1433 = vpack.c.b16 %v1169, %v1161
    %v1434 = vpack.c.b16 %v1170, %v1162
    %v1435 = vpack.c.b16 %v1171, %v1163
    %v1436 = vpack.c.b16 %v1172, %v1164
    %v1437 = vpack.c.b16 %v1181, %v1173
    %v1438 = vpack.c.b16 %v1182, %v1174
    %v1439 = vpack.c.b16 %v1183, %v1175
    %v1440 = vpack.c.b16 %v1184, %v1176
    %v1441 = vpack.c.b16 %v1185, %v1177
    %v1442 = vpack.c.b16 %v1186, %v1178
    %v1443 = vpack.c.b16 %v1187, %v1179
    %v1444 = vpack.c.b16 %v1188, %v1180
    %1701 = vmatprep.subr.bf16.mxu0 %v1190
    %1702 = vmatpush1.bf16.msra.mxu0 %v1189
    %1703 = vmatprep.subr.bf16.mxu0 %v1198
    %1704 = vmatpush1.bf16.msra.mxu0 %v1197
    %1705 = vmatprep.subr.bf16.mxu0 %v1206
    %1706 = vmatpush1.bf16.msra.mxu0 %v1205
    %1707 = vmatprep.subr.bf16.mxu0 %v1214
    %1708 = vmatpush1.bf16.msra.mxu0 %v1213
    %1709 = vmatprep.subr.bf16.mxu0 %v1222
    %1710 = vmatpush1.bf16.msra.mxu0 %v1221
    %1711 = vmatprep.subr.bf16.mxu0 %v1230
    %1712 = vmatpush1.bf16.msra.mxu0 %v1229
    %1713 = vmatprep.subr.bf16.mxu0 %v1238
    %1714 = vmatpush1.bf16.msra.mxu0 %v1237
    %1715 = vmatprep.subr.bf16.mxu0 %v1246
    %1716 = vmatpush1.bf16.msra.mxu0 %v1245
    %1717 = vmatprep.subr.bf16.mxu0 %v1254
    %1718 = vmatpush1.bf16.msra.mxu0 %v1253
    %1719 = vmatprep.subr.bf16.mxu0 %v1262
    %1720 = vmatpush1.bf16.msra.mxu0 %v1261
    %1721 = vmatprep.subr.bf16.mxu0 %v1270
    %1722 = vmatpush1.bf16.msra.mxu0 %v1269
    %1723 = vmatprep.subr.bf16.mxu0 %v1278
    %1724 = vmatpush1.bf16.msra.mxu0 %v1277
    %1725 = vmatprep.subr.bf16.mxu0 %v1286
    %1726 = vmatpush1.bf16.msra.mxu0 %v1285
    %1727 = vmatprep.subr.bf16.mxu0 %v1294
    %1728 = vmatpush1.bf16.msra.mxu0 %v1293
    %1729 = vmatprep.subr.bf16.mxu0 %v1302
    %1730 = vmatpush1.bf16.msra.mxu0 %v1301
    %1731 = vmatprep.subr.bf16.mxu0 %v1310
    %1732 = vmatpush1.bf16.msra.mxu0 %v1309
    %1733 = vmatprep.mubr.bf16.mxu0 %v406
    %1734 = vmatmul.mubr.bf16.gmra.mrb[0].mxu0 %v405
    %v1735 = vpop.f32.mrb[0].mxu0
    %v1736 = vadd.f32 %v344, %v1735
    %v1737 = vpop.f32.mrb[0].mxu0
    %v1738 = vadd.f32 %v348, %v1737
    %v1739 = vpop.f32.mrb[0].mxu0
    %v1740 = vadd.f32 %v344, %v1739
    %v1741 = vpop.f32.mrb[0].mxu0
    %v1742 = vadd.f32 %v348, %v1741
    %1743 = vmatprep.mubr.bf16.mxu0 %v410
    %1744 = vmatmul.mubr.bf16.gmra.mrb[0].mxu0 %v409
    %v1745 = vpop.f32.mrb[0].mxu0
    %v1746 = vadd.f32 %v344, %v1745
    %v1747 = vpop.f32.mrb[0].mxu0
    %v1748 = vadd.f32 %v348, %v1747
    %v1749 = vpop.f32.mrb[0].mxu0
    %v1750 = vadd.f32 %v344, %v1749
    %v1751 = vpop.f32.mrb[0].mxu0
    %v1752 = vadd.f32 %v348, %v1751
    %1753 = vdwg.mxu0
    %1754 = vmatprep.subr.bf16.mxu0 %v1318
    %1755 = vmatpush1.bf16.msra.mxu0 %v1317
    %1756 = vmatprep.subr.bf16.mxu0 %v1326
    %1757 = vmatpush1.bf16.msra.mxu0 %v1325
    %1758 = vmatprep.subr.bf16.mxu0 %v1334
    %1759 = vmatpush1.bf16.msra.mxu0 %v1333
    %1760 = vmatprep.subr.bf16.mxu0 %v1342
    %1761 = vmatpush1.bf16.msra.mxu0 %v1341
    %1762 = vmatprep.subr.bf16.mxu0 %v1350
    %1763 = vmatpush1.bf16.msra.mxu0 %v1349
    %1764 = vmatprep.subr.bf16.mxu0 %v1358
    %1765 = vmatpush1.bf16.msra.mxu0 %v1357
    %1766 = vmatprep.subr.bf16.mxu0 %v1366
    %1767 = vmatpush1.bf16.msra.mxu0 %v1365
    %1768 = vmatprep.subr.bf16.mxu0 %v1374
    %1769 = vmatpush1.bf16.msra.mxu0 %v1373
    %1770 = vmatprep.subr.bf16.mxu0 %v1382
    %1771 = vmatpush1.bf16.msra.mxu0 %v1381
    %1772 = vmatprep.subr.bf16.mxu0 %v1390
    %1773 = vmatpush1.bf16.msra.mxu0 %v1389
    %1774 = vmatprep.subr.bf16.mxu0 %v1398
    %1775 = vmatpush1.bf16.msra.mxu0 %v1397
    %1776 = vmatprep.subr.bf16.mxu0 %v1406
    %1777 = vmatpush1.bf16.msra.mxu0 %v1405
    %1778 = vmatprep.subr.bf16.mxu0 %v1414
    %1779 = vmatpush1.bf16.msra.mxu0 %v1413
    %1780 = vmatprep.subr.bf16.mxu0 %v1422
    %1781 = vmatpush1.bf16.msra.mxu0 %v1421
    %1782 = vmatprep.subr.bf16.mxu0 %v1430
    %1783 = vmatpush1.bf16.msra.mxu0 %v1429
    %1784 = vmatprep.subr.bf16.mxu0 %v1438
    %1785 = vmatpush1.bf16.msra.mxu0 %v1437
    %1786 = vmatprep.mubr.bf16.mxu0 %v408
    %1787 = vmatmul.mubr.bf16.gmra.mrb[0].mxu0 %v407
    %v1788 = vpop.f32.mrb[0].mxu0
    %v1789 = vadd.f32 %v1736, %v1788
    %v1790 = vpop.f32.mrb[0].mxu0
    %v1791 = vadd.f32 %v1738, %v1790
    %v1792 = vpop.f32.mrb[0].mxu0
    %v1793 = vadd.f32 %v1740, %v1792
    %v1794 = vpop.f32.mrb[0].mxu0
    %v1795 = vadd.f32 %v1742, %v1794
    %1796 = vmatprep.mubr.bf16.mxu0 %v412
    %1797 = vmatmul.mubr.bf16.gmra.mrb[0].mxu0 %v411
    %v1798 = vpop.f32.mrb[0].mxu0
    %v1799 = vadd.f32 %v1746, %v1798
    %v1800 = vpop.f32.mrb[0].mxu0
    %v1801 = vadd.f32 %v1748, %v1800
    %v1802 = vpop.f32.mrb[0].mxu0
    %v1803 = vadd.f32 %v1750, %v1802
    %v1804 = vpop.f32.mrb[0].mxu0
    %v1805 = vadd.f32 %v1752, %v1804
    %1806 = vdwg.mxu0
    %1807 = vmatprep.subr.bf16.mxu0 %v1192
    %1808 = vmatpush1.bf16.msra.mxu0 %v1191
    %1809 = vmatprep.subr.bf16.mxu0 %v1200
    %1810 = vmatpush1.bf16.msra.mxu0 %v1199
    %1811 = vmatprep.subr.bf16.mxu0 %v1208
    %1812 = vmatpush1.bf16.msra.mxu0 %v1207
    %1813 = vmatprep.subr.bf16.mxu0 %v1216
    %1814 = vmatpush1.bf16.msra.mxu0 %v1215
    %1815 = vmatprep.subr.bf16.mxu0 %v1224
    %1816 = vmatpush1.bf16.msra.mxu0 %v1223
    %1817 = vmatprep.subr.bf16.mxu0 %v1232
    %1818 = vmatpush1.bf16.msra.mxu0 %v1231
    %1819 = vmatprep.subr.bf16.mxu0 %v1240
    %1820 = vmatpush1.bf16.msra.mxu0 %v1239
    %1821 = vmatprep.subr.bf16.mxu0 %v1248
    %1822 = vmatpush1.bf16.msra.mxu0 %v1247
    %1823 = vmatprep.subr.bf16.mxu0 %v1256
    %1824 = vmatpush1.bf16.msra.mxu0 %v1255
    %1825 = vmatprep.subr.bf16.mxu0 %v1264
    %1826 = vmatpush1.bf16.msra.mxu0 %v1263
    %1827 = vmatprep.subr.bf16.mxu0 %v1272
    %1828 = vmatpush1.bf16.msra.mxu0 %v1271
    %1829 = vmatprep.subr.bf16.mxu0 %v1280
    %1830 = vmatpush1.bf16.msra.mxu0 %v1279
    %1831 = vmatprep.subr.bf16.mxu0 %v1288
    %1832 = vmatpush1.bf16.msra.mxu0 %v1287
    %1833 = vmatprep.subr.bf16.mxu0 %v1296
    %1834 = vmatpush1.bf16.msra.mxu0 %v1295
    %1835 = vmatprep.subr.bf16.mxu0 %v1304
    %1836 = vmatpush1.bf16.msra.mxu0 %v1303
    %1837 = vmatprep.subr.bf16.mxu0 %v1312
    %1838 = vmatpush1.bf16.msra.mxu0 %v1311
    %1839 = vmatprep.mubr.bf16.mxu0 %v406
    %1840 = vmatmul.mubr.bf16.gmra.mrb[0].mxu0 %v405
    %v1841 = vpop.f32.mrb[0].mxu0
    %v1842 = vadd.f32 %v352, %v1841
    %v1843 = vpop.f32.mrb[0].mxu0
    %v1844 = vadd.f32 %v356, %v1843
    %v1845 = vpop.f32.mrb[0].mxu0
    %v1846 = vadd.f32 %v352, %v1845
    %v1847 = vpop.f32.mrb[0].mxu0
    %v1848 = vadd.f32 %v356, %v1847
    %1849 = vmatprep.mubr.bf16.mxu0 %v410
    %1850 = vmatmul.mubr.bf16.gmra.mrb[0].mxu0 %v409
    %v1851 = vpop.f32.mrb[0].mxu0
    %v1852 = vadd.f32 %v352, %v1851
    %v1853 = vpop.f32.mrb[0].mxu0
    %v1854 = vadd.f32 %v356, %v1853
    %v1855 = vpop.f32.mrb[0].mxu0
    %v1856 = vadd.f32 %v352, %v1855
    %v1857 = vpop.f32.mrb[0].mxu0
    %v1858 = vadd.f32 %v356, %v1857
    %1859 = vdwg.mxu0
    %1860 = vmatprep.subr.bf16.mxu0 %v1320
    %1861 = vmatpush1.bf16.msra.mxu0 %v1319
    %1862 = vmatprep.subr.bf16.mxu0 %v1328
    %1863 = vmatpush1.bf16.msra.mxu0 %v1327
    %1864 = vmatprep.subr.bf16.mxu0 %v1336
    %1865 = vmatpush1.bf16.msra.mxu0 %v1335
    %1866 = vmatprep.subr.bf16.mxu0 %v1344
    %1867 = vmatpush1.bf16.msra.mxu0 %v1343
    %1868 = vmatprep.subr.bf16.mxu0 %v1352
    %1869 = vmatpush1.bf16.msra.mxu0 %v1351
    %1870 = vmatprep.subr.bf16.mxu0 %v1360
    %1871 = vmatpush1.bf16.msra.mxu0 %v1359
    %1872 = vmatprep.subr.bf16.mxu0 %v1368
    %1873 = vmatpush1.bf16.msra.mxu0 %v1367
    %1874 = vmatprep.subr.bf16.mxu0 %v1376
    %1875 = vmatpush1.bf16.msra.mxu0 %v1375
    %1876 = vmatprep.subr.bf16.mxu0 %v1384
    %1877 = vmatpush1.bf16.msra.mxu0 %v1383
    %1878 = vmatprep.subr.bf16.mxu0 %v1392
    %1879 = vmatpush1.bf16.msra.mxu0 %v1391
    %1880 = vmatprep.subr.bf16.mxu0 %v1400
    %1881 = vmatpush1.bf16.msra.mxu0 %v1399
    %1882 = vmatprep.subr.bf16.mxu0 %v1408
    %1883 = vmatpush1.bf16.msra.mxu0 %v1407
    %1884 = vmatprep.subr.bf16.mxu0 %v1416
    %1885 = vmatpush1.bf16.msra.mxu0 %v1415
    %1886 = vmatprep.subr.bf16.mxu0 %v1424
    %1887 = vmatpush1.bf16.msra.mxu0 %v1423
    %1888 = vmatprep.subr.bf16.mxu0 %v1432
    %1889 = vmatpush1.bf16.msra.mxu0 %v1431
    %1890 = vmatprep.subr.bf16.mxu0 %v1440
    %1891 = vmatpush1.bf16.msra.mxu0 %v1439
    %1892 = vmatprep.mubr.bf16.mxu0 %v408
    %1893 = vmatmul.mubr.bf16.gmra.mrb[0].mxu0 %v407
    %v1894 = vpop.f32.mrb[0].mxu0
    %v1895 = vadd.f32 %v1842, %v1894
    %v1896 = vpop.f32.mrb[0].mxu0
    %v1897 = vadd.f32 %v1844, %v1896
    %v1898 = vpop.f32.mrb[0].mxu0
    %v1899 = vadd.f32 %v1846, %v1898
    %v1900 = vpop.f32.mrb[0].mxu0
    %v1901 = vadd.f32 %v1848, %v1900
    %1902 = vmatprep.mubr.bf16.mxu0 %v412
    %1903 = vmatmul.mubr.bf16.gmra.mrb[0].mxu0 %v411
    %v1904 = vpop.f32.mrb[0].mxu0
    %v1905 = vadd.f32 %v1852, %v1904
    %v1906 = vpop.f32.mrb[0].mxu0
    %v1907 = vadd.f32 %v1854, %v1906
    %v1908 = vpop.f32.mrb[0].mxu0
    %v1909 = vadd.f32 %v1856, %v1908
    %v1910 = vpop.f32.mrb[0].mxu0
    %v1911 = vadd.f32 %v1858, %v1910
    %1912 = vdwg.mxu0
    %1913 = vmatprep.subr.bf16.mxu0 %v1194
    %1914 = vmatpush1.bf16.msra.mxu0 %v1193
    %1915 = vmatprep.subr.bf16.mxu0 %v1202
    %1916 = vmatpush1.bf16.msra.mxu0 %v1201
    %1917 = vmatprep.subr.bf16.mxu0 %v1210
    %1918 = vmatpush1.bf16.msra.mxu0 %v1209
    %1919 = vmatprep.subr.bf16.mxu0 %v1218
    %1920 = vmatpush1.bf16.msra.mxu0 %v1217
    %1921 = vmatprep.subr.bf16.mxu0 %v1226
    %1922 = vmatpush1.bf16.msra.mxu0 %v1225
    %1923 = vmatprep.subr.bf16.mxu0 %v1234
    %1924 = vmatpush1.bf16.msra.mxu0 %v1233
    %1925 = vmatprep.subr.bf16.mxu0 %v1242
    %1926 = vmatpush1.bf16.msra.mxu0 %v1241
    %1927 = vmatprep.subr.bf16.mxu0 %v1250
    %1928 = vmatpush1.bf16.msra.mxu0 %v1249
    %1929 = vmatprep.subr.bf16.mxu0 %v1258
    %1930 = vmatpush1.bf16.msra.mxu0 %v1257
    %1931 = vmatprep.subr.bf16.mxu0 %v1266
    %1932 = vmatpush1.bf16.msra.mxu0 %v1265
    %1933 = vmatprep.subr.bf16.mxu0 %v1274
    %1934 = vmatpush1.bf16.msra.mxu0 %v1273
    %1935 = vmatprep.subr.bf16.mxu0 %v1282
    %1936 = vmatpush1.bf16.msra.mxu0 %v1281
    %1937 = vmatprep.subr.bf16.mxu0 %v1290
    %1938 = vmatpush1.bf16.msra.mxu0 %v1289
    %1939 = vmatprep.subr.bf16.mxu0 %v1298
    %1940 = vmatpush1.bf16.msra.mxu0 %v1297
    %1941 = vmatprep.subr.bf16.mxu0 %v1306
    %1942 = vmatpush1.bf16.msra.mxu0 %v1305
    %1943 = vmatprep.subr.bf16.mxu0 %v1314
    %1944 = vmatpush1.bf16.msra.mxu0 %v1313
    %1945 = vmatprep.mubr.bf16.mxu0 %v406
    %1946 = vmatmul.mubr.bf16.gmra.mrb[0].mxu0 %v405
    %v1947 = vpop.f32.mrb[0].mxu0
    %v1948 = vadd.f32 %v360, %v1947
    %v1949 = vpop.f32.mrb[0].mxu0
    %v1950 = vadd.f32 %v364, %v1949
    %v1951 = vpop.f32.mrb[0].mxu0
    %v1952 = vadd.f32 %v360, %v1951
    %v1953 = vpop.f32.mrb[0].mxu0
    %v1954 = vadd.f32 %v364, %v1953
    %1955 = vmatprep.mubr.bf16.mxu0 %v410
    %1956 = vmatmul.mubr.bf16.gmra.mrb[0].mxu0 %v409
    %v1957 = vpop.f32.mrb[0].mxu0
    %v1958 = vadd.f32 %v360, %v1957
    %v1959 = vpop.f32.mrb[0].mxu0
    %v1960 = vadd.f32 %v364, %v1959
    %v1961 = vpop.f32.mrb[0].mxu0
    %v1962 = vadd.f32 %v360, %v1961
    %v1963 = vpop.f32.mrb[0].mxu0
    %v1964 = vadd.f32 %v364, %v1963
    %1965 = vdwg.mxu0
    %1966 = vmatprep.subr.bf16.mxu0 %v1322
    %1967 = vmatpush1.bf16.msra.mxu0 %v1321
    %1968 = vmatprep.subr.bf16.mxu0 %v1330
    %1969 = vmatpush1.bf16.msra.mxu0 %v1329
    %1970 = vmatprep.subr.bf16.mxu0 %v1338
    %1971 = vmatpush1.bf16.msra.mxu0 %v1337
    %1972 = vmatprep.subr.bf16.mxu0 %v1346
    %1973 = vmatpush1.bf16.msra.mxu0 %v1345
    %1974 = vmatprep.subr.bf16.mxu0 %v1354
    %1975 = vmatpush1.bf16.msra.mxu0 %v1353
    %1976 = vmatprep.subr.bf16.mxu0 %v1362
    %1977 = vmatpush1.bf16.msra.mxu0 %v1361
    %1978 = vmatprep.subr.bf16.mxu0 %v1370
    %1979 = vmatpush1.bf16.msra.mxu0 %v1369
    %1980 = vmatprep.subr.bf16.mxu0 %v1378
    %1981 = vmatpush1.bf16.msra.mxu0 %v1377
    %1982 = vmatprep.subr.bf16.mxu0 %v1386
    %1983 = vmatpush1.bf16.msra.mxu0 %v1385
    %1984 = vmatprep.subr.bf16.mxu0 %v1394
    %1985 = vmatpush1.bf16.msra.mxu0 %v1393
    %1986 = vmatprep.subr.bf16.mxu0 %v1402
    %1987 = vmatpush1.bf16.msra.mxu0 %v1401
    %1988 = vmatprep.subr.bf16.mxu0 %v1410
    %1989 = vmatpush1.bf16.msra.mxu0 %v1409
    %1990 = vmatprep.subr.bf16.mxu0 %v1418
    %1991 = vmatpush1.bf16.msra.mxu0 %v1417
    %1992 = vmatprep.subr.bf16.mxu0 %v1426
    %1993 = vmatpush1.bf16.msra.mxu0 %v1425
    %1994 = vmatprep.subr.bf16.mxu0 %v1434
    %1995 = vmatpush1.bf16.msra.mxu0 %v1433
    %1996 = vmatprep.subr.bf16.mxu0 %v1442
    %1997 = vmatpush1.bf16.msra.mxu0 %v1441
    %1998 = vmatprep.mubr.bf16.mxu0 %v408
    %1999 = vmatmul.mubr.bf16.gmra.mrb[0].mxu0 %v407
    %v2000 = vpop.f32.mrb[0].mxu0
    %v2001 = vadd.f32 %v1948, %v2000
    %v2002 = vpop.f32.mrb[0].mxu0
    %v2003 = vadd.f32 %v1950, %v2002
    %v2004 = vpop.f32.mrb[0].mxu0
    %v2005 = vadd.f32 %v1952, %v2004
    %v2006 = vpop.f32.mrb[0].mxu0
    %v2007 = vadd.f32 %v1954, %v2006
    %2008 = vmatprep.mubr.bf16.mxu0 %v412
    %2009 = vmatmul.mubr.bf16.gmra.mrb[0].mxu0 %v411
    %v2010 = vpop.f32.mrb[0].mxu0
    %v2011 = vadd.f32 %v1958, %v2010
    %v2012 = vpop.f32.mrb[0].mxu0
    %v2013 = vadd.f32 %v1960, %v2012
    %v2014 = vpop.f32.mrb[0].mxu0
    %v2015 = vadd.f32 %v1962, %v2014
    %v2016 = vpop.f32.mrb[0].mxu0
    %v2017 = vadd.f32 %v1964, %v2016
    %2018 = vdwg.mxu0
    %2019 = vmatprep.subr.bf16.mxu0 %v1196
    %2020 = vmatpush1.bf16.msra.mxu0 %v1195
    %2021 = vmatprep.subr.bf16.mxu0 %v1204
    %2022 = vmatpush1.bf16.msra.mxu0 %v1203
    %2023 = vmatprep.subr.bf16.mxu0 %v1212
    %2024 = vmatpush1.bf16.msra.mxu0 %v1211
    %2025 = vmatprep.subr.bf16.mxu0 %v1220
    %2026 = vmatpush1.bf16.msra.mxu0 %v1219
    %2027 = vmatprep.subr.bf16.mxu0 %v1228
    %2028 = vmatpush1.bf16.msra.mxu0 %v1227
    %2029 = vmatprep.subr.bf16.mxu0 %v1236
    %2030 = vmatpush1.bf16.msra.mxu0 %v1235
    %2031 = vmatprep.subr.bf16.mxu0 %v1244
    %2032 = vmatpush1.bf16.msra.mxu0 %v1243
    %2033 = vmatprep.subr.bf16.mxu0 %v1252
    %2034 = vmatpush1.bf16.msra.mxu0 %v1251
    %2035 = vmatprep.subr.bf16.mxu0 %v1260
    %2036 = vmatpush1.bf16.msra.mxu0 %v1259
    %2037 = vmatprep.subr.bf16.mxu0 %v1268
    %2038 = vmatpush1.bf16.msra.mxu0 %v1267
    %2039 = vmatprep.subr.bf16.mxu0 %v1276
    %2040 = vmatpush1.bf16.msra.mxu0 %v1275
    %2041 = vmatprep.subr.bf16.mxu0 %v1284
    %2042 = vmatpush1.bf16.msra.mxu0 %v1283
    %2043 = vmatprep.subr.bf16.mxu0 %v1292
    %2044 = vmatpush1.bf16.msra.mxu0 %v1291
    %2045 = vmatprep.subr.bf16.mxu0 %v1300
    %2046 = vmatpush1.bf16.msra.mxu0 %v1299
    %2047 = vmatprep.subr.bf16.mxu0 %v1308
    %2048 = vmatpush1.bf16.msra.mxu0 %v1307
    %2049 = vmatprep.subr.bf16.mxu0 %v1316
    %2050 = vmatpush1.bf16.msra.mxu0 %v1315
    %2051 = vmatprep.mubr.bf16.mxu0 %v406
    %2052 = vmatmul.mubr.bf16.gmra.mrb[0].mxu0 %v405
    %v2053 = vpop.f32.mrb[0].mxu0
    %v2054 = vadd.f32 %v368, %v2053
    %v2055 = vpop.f32.mrb[0].mxu0
    %v2056 = vadd.f32 %v372, %v2055
    %v2057 = vpop.f32.mrb[0].mxu0
    %v2058 = vadd.f32 %v368, %v2057
    %v2059 = vpop.f32.mrb[0].mxu0
    %v2060 = vadd.f32 %v372, %v2059
    %2061 = vmatprep.mubr.bf16.mxu0 %v410
    %2062 = vmatmul.mubr.bf16.gmra.mrb[0].mxu0 %v409
    %v2063 = vpop.f32.mrb[0].mxu0
    %v2064 = vadd.f32 %v368, %v2063
    %v2065 = vpop.f32.mrb[0].mxu0
    %v2066 = vadd.f32 %v372, %v2065
    %v2067 = vpop.f32.mrb[0].mxu0
    %v2068 = vadd.f32 %v368, %v2067
    %v2069 = vpop.f32.mrb[0].mxu0
    %v2070 = vadd.f32 %v372, %v2069
    %2071 = vdwg.mxu0
    %2072 = vmatprep.subr.bf16.mxu0 %v1324
    %2073 = vmatpush1.bf16.msra.mxu0 %v1323
    %2074 = vmatprep.subr.bf16.mxu0 %v1332
    %2075 = vmatpush1.bf16.msra.mxu0 %v1331
    %2076 = vmatprep.subr.bf16.mxu0 %v1340
    %2077 = vmatpush1.bf16.msra.mxu0 %v1339
    %2078 = vmatprep.subr.bf16.mxu0 %v1348
    %2079 = vmatpush1.bf16.msra.mxu0 %v1347
    %2080 = vmatprep.subr.bf16.mxu0 %v1356
    %2081 = vmatpush1.bf16.msra.mxu0 %v1355
    %2082 = vmatprep.subr.bf16.mxu0 %v1364
    %2083 = vmatpush1.bf16.msra.mxu0 %v1363
    %2084 = vmatprep.subr.bf16.mxu0 %v1372
    %2085 = vmatpush1.bf16.msra.mxu0 %v1371
    %2086 = vmatprep.subr.bf16.mxu0 %v1380
    %2087 = vmatpush1.bf16.msra.mxu0 %v1379
    %2088 = vmatprep.subr.bf16.mxu0 %v1388
    %2089 = vmatpush1.bf16.msra.mxu0 %v1387
    %2090 = vmatprep.subr.bf16.mxu0 %v1396
    %2091 = vmatpush1.bf16.msra.mxu0 %v1395
    %2092 = vmatprep.subr.bf16.mxu0 %v1404
    %2093 = vmatpush1.bf16.msra.mxu0 %v1403
    %2094 = vmatprep.subr.bf16.mxu0 %v1412
    %2095 = vmatpush1.bf16.msra.mxu0 %v1411
    %2096 = vmatprep.subr.bf16.mxu0 %v1420
    %2097 = vmatpush1.bf16.msra.mxu0 %v1419
    %2098 = vmatprep.subr.bf16.mxu0 %v1428
    %2099 = vmatpush1.bf16.msra.mxu0 %v1427
    %2100 = vmatprep.subr.bf16.mxu0 %v1436
    %2101 = vmatpush1.bf16.msra.mxu0 %v1435
    %2102 = vmatprep.subr.bf16.mxu0 %v1444
    %2103 = vmatpush1.bf16.msra.mxu0 %v1443
    %2104 = vmatprep.mubr.bf16.mxu0 %v408
    %2105 = vmatmul.mubr.bf16.gmra.mrb[0].mxu0 %v407
    %v2106 = vpop.f32.mrb[0].mxu0
    %v2107 = vadd.f32 %v2054, %v2106
    %v2108 = vpop.f32.mrb[0].mxu0
    %v2109 = vadd.f32 %v2056, %v2108
    %v2110 = vpop.f32.mrb[0].mxu0
    %v2111 = vadd.f32 %v2058, %v2110
    %v2112 = vpop.f32.mrb[0].mxu0
    %v2113 = vadd.f32 %v2060, %v2112
    %2114 = vmatprep.mubr.bf16.mxu0 %v412
    %2115 = vmatmul.mubr.bf16.gmra.mrb[0].mxu0 %v411
    %v2116 = vpop.f32.mrb[0].mxu0
    %v2117 = vadd.f32 %v2064, %v2116
    %v2118 = vpop.f32.mrb[0].mxu0
    %v2119 = vadd.f32 %v2066, %v2118
    %v2120 = vpop.f32.mrb[0].mxu0
    %v2121 = vadd.f32 %v2068, %v2120
    %v2122 = vpop.f32.mrb[0].mxu0
    %v2123 = vadd.f32 %v2070, %v2122
    %2124 = vdwg.mxu0
    %v2125 = vmax.f32 %v1789, 0.0
    %v2126 = vmax.f32 %v1791, 0.0
    %v2127 = vmax.f32 %v1895, 0.0
    %v2128 = vmax.f32 %v1897, 0.0
    %v2129 = vmax.f32 %v2001, 0.0
    %v2130 = vmax.f32 %v2003, 0.0
    %v2131 = vmax.f32 %v2107, 0.0
    %v2132 = vmax.f32 %v2109, 0.0
    %v2133 = vmax.f32 %v1793, 0.0
    %v2134 = vmax.f32 %v1795, 0.0
    %v2135 = vmax.f32 %v1899, 0.0
    %v2136 = vmax.f32 %v1901, 0.0
    %v2137 = vmax.f32 %v2005, 0.0
    %v2138 = vmax.f32 %v2007, 0.0
    %v2139 = vmax.f32 %v2111, 0.0
    %v2140 = vmax.f32 %v2113, 0.0
    %v2141 = vmax.f32 %v1799, 0.0
    %v2142 = vmax.f32 %v1801, 0.0
    %v2143 = vmax.f32 %v1905, 0.0
    %v2144 = vmax.f32 %v1907, 0.0
    %v2145 = vmax.f32 %v2011, 0.0
    %v2146 = vmax.f32 %v2013, 0.0
    %v2147 = vmax.f32 %v2117, 0.0
    %v2148 = vmax.f32 %v2119, 0.0
    %v2149 = vmax.f32 %v1803, 0.0
    %v2150 = vmax.f32 %v1805, 0.0
    %v2151 = vmax.f32 %v1909, 0.0
    %v2152 = vmax.f32 %v1911, 0.0
    %v2153 = vmax.f32 %v2015, 0.0
    %v2154 = vmax.f32 %v2017, 0.0
    %v2155 = vmax.f32 %v2121, 0.0
    %v2156 = vmax.f32 %v2123, 0.0
    %v2157 = vpack.c.bf16 %v2133, %v2125
    %v2158 = vpack.c.bf16 %v2134, %v2126
    %v2159 = vpack.c.bf16 %v2135, %v2127
    %v2160 = vpack.c.bf16 %v2136, %v2128
    %v2161 = vpack.c.bf16 %v2137, %v2129
    %v2162 = vpack.c.bf16 %v2138, %v2130
    %v2163 = vpack.c.bf16 %v2139, %v2131
    %v2164 = vpack.c.bf16 %v2140, %v2132
    %v2165 = vpack.c.bf16 %v2149, %v2141
    %v2166 = vpack.c.bf16 %v2150, %v2142
    %v2167 = vpack.c.bf16 %v2151, %v2143
    %v2168 = vpack.c.bf16 %v2152, %v2144
    %v2169 = vpack.c.bf16 %v2153, %v2145
    %v2170 = vpack.c.bf16 %v2154, %v2146
    %v2171 = vpack.c.bf16 %v2155, %v2147
    %v2172 = vpack.c.bf16 %v2156, %v2148
    %v2173 = vld [vmem:[#allocation8] sm:$0xf]
    %v2174 = vld [vmem:[#allocation8 + $0x4] sm:$0xf]
    %v2175 = vld [vmem:[#allocation8 + $0x8] sm:$0xf]
    %v2176 = vld [vmem:[#allocation8 + $0xc] sm:$0xf]
    %v2177 = vld [vmem:[#allocation8 + $0x10] sm:$0xf]
    %v2178 = vld [vmem:[#allocation8 + $0x14] sm:$0xf]
    %v2179 = vld [vmem:[#allocation8 + $0x18] sm:$0xf]
    %v2180 = vld [vmem:[#allocation8 + $0x1c] sm:$0xf]
    %v2181 = vld [vmem:[#allocation8 + $0x20] sm:$0xf]
    %v2182 = vld [vmem:[#allocation8 + $0x24] sm:$0xf]
    %v2183 = vld [vmem:[#allocation8 + $0x28] sm:$0xf]
    %v2184 = vld [vmem:[#allocation8 + $0x2c] sm:$0xf]
    %v2185 = vld [vmem:[#allocation8 + $0x30] sm:$0xf]
    %v2186 = vld [vmem:[#allocation8 + $0x34] sm:$0xf]
    %v2187 = vld [vmem:[#allocation8 + $0x38] sm:$0xf]
    %v2188 = vld [vmem:[#allocation8 + $0x3c] sm:$0xf]
    %v2189 = vld [vmem:[#allocation8 + $0x40] sm:$0xf]
    %v2190 = vld [vmem:[#allocation8 + $0x44] sm:$0xf]
    %v2191 = vld [vmem:[#allocation8 + $0x48] sm:$0xf]
    %v2192 = vld [vmem:[#allocation8 + $0x4c] sm:$0xf]
    %v2193 = vld [vmem:[#allocation8 + $0x50] sm:$0xf]
    %v2194 = vld [vmem:[#allocation8 + $0x54] sm:$0xf]
    %v2195 = vld [vmem:[#allocation8 + $0x58] sm:$0xf]
    %v2196 = vld [vmem:[#allocation8 + $0x5c] sm:$0xf]
    %v2197 = vld [vmem:[#allocation8 + $0x60] sm:$0xf]
    %v2198 = vld [vmem:[#allocation8 + $0x64] sm:$0xf]
    %v2199 = vld [vmem:[#allocation8 + $0x68] sm:$0xf]
    %v2200 = vld [vmem:[#allocation8 + $0x6c] sm:$0xf]
    %v2201 = vld [vmem:[#allocation8 + $0x70] sm:$0xf]
    %v2202 = vld [vmem:[#allocation8 + $0x74] sm:$0xf]
    %v2203 = vld [vmem:[#allocation8 + $0x78] sm:$0xf]
    %v2204 = vld [vmem:[#allocation8 + $0x7c] sm:$0xf]
    %v2205 = vld [vmem:[#allocation8 + $0x80] sm:$0xf]
    %v2206 = vld [vmem:[#allocation8 + $0x84] sm:$0xf]
    %v2207 = vld [vmem:[#allocation8 + $0x88] sm:$0xf]
    %v2208 = vld [vmem:[#allocation8 + $0x8c] sm:$0xf]
    %v2209 = vld [vmem:[#allocation8 + $0x90] sm:$0xf]
    %v2210 = vld [vmem:[#allocation8 + $0x94] sm:$0xf]
    %v2211 = vld [vmem:[#allocation8 + $0x98] sm:$0xf]
    %v2212 = vld [vmem:[#allocation8 + $0x9c] sm:$0xf]
    %v2213 = vld [vmem:[#allocation8 + $0xa0] sm:$0xf]
    %v2214 = vld [vmem:[#allocation8 + $0xa4] sm:$0xf]
    %v2215 = vld [vmem:[#allocation8 + $0xa8] sm:$0xf]
    %v2216 = vld [vmem:[#allocation8 + $0xac] sm:$0xf]
    %v2217 = vld [vmem:[#allocation8 + $0xb0] sm:$0xf]
    %v2218 = vld [vmem:[#allocation8 + $0xb4] sm:$0xf]
    %v2219 = vld [vmem:[#allocation8 + $0xb8] sm:$0xf]
    %v2220 = vld [vmem:[#allocation8 + $0xbc] sm:$0xf]
    %v2221 = vld [vmem:[#allocation8 + $0xc0] sm:$0xf]
    %v2222 = vld [vmem:[#allocation8 + $0xc4] sm:$0xf]
    %v2223 = vld [vmem:[#allocation8 + $0xc8] sm:$0xf]
    %v2224 = vld [vmem:[#allocation8 + $0xcc] sm:$0xf]
    %v2225 = vld [vmem:[#allocation8 + $0xd0] sm:$0xf]
    %v2226 = vld [vmem:[#allocation8 + $0xd4] sm:$0xf]
    %v2227 = vld [vmem:[#allocation8 + $0xd8] sm:$0xf]
    %v2228 = vld [vmem:[#allocation8 + $0xdc] sm:$0xf]
    %v2229 = vld [vmem:[#allocation8 + $0xe0] sm:$0xf]
    %v2230 = vld [vmem:[#allocation8 + $0xe4] sm:$0xf]
    %v2231 = vld [vmem:[#allocation8 + $0xe8] sm:$0xf]
    %v2232 = vld [vmem:[#allocation8 + $0xec] sm:$0xf]
    %v2233 = vld [vmem:[#allocation8 + $0xf0] sm:$0xf]
    %v2234 = vld [vmem:[#allocation8 + $0xf4] sm:$0xf]
    %v2235 = vld [vmem:[#allocation8 + $0xf8] sm:$0xf]
    %v2236 = vld [vmem:[#allocation8 + $0xfc] sm:$0xf]
    %v2237 = vld [vmem:[#allocation8 + $0x100] sm:$0xf]
    %v2238 = vld [vmem:[#allocation8 + $0x104] sm:$0xf]
    %v2239 = vld [vmem:[#allocation8 + $0x108] sm:$0xf]
    %v2240 = vld [vmem:[#allocation8 + $0x10c] sm:$0xf]
    %v2241 = vld [vmem:[#allocation8 + $0x110] sm:$0xf]
    %v2242 = vld [vmem:[#allocation8 + $0x114] sm:$0xf]
    %v2243 = vld [vmem:[#allocation8 + $0x118] sm:$0xf]
    %v2244 = vld [vmem:[#allocation8 + $0x11c] sm:$0xf]
    %v2245 = vld [vmem:[#allocation8 + $0x120] sm:$0xf]
    %v2246 = vld [vmem:[#allocation8 + $0x124] sm:$0xf]
    %v2247 = vld [vmem:[#allocation8 + $0x128] sm:$0xf]
    %v2248 = vld [vmem:[#allocation8 + $0x12c] sm:$0xf]
    %v2249 = vld [vmem:[#allocation8 + $0x130] sm:$0xf]
    %v2250 = vld [vmem:[#allocation8 + $0x134] sm:$0xf]
    %v2251 = vld [vmem:[#allocation8 + $0x138] sm:$0xf]
    %v2252 = vld [vmem:[#allocation8 + $0x13c] sm:$0xf]
    %v2253 = vld [vmem:[#allocation8 + $0x140] sm:$0xf]
    %v2254 = vld [vmem:[#allocation8 + $0x144] sm:$0xf]
    %v2255 = vld [vmem:[#allocation8 + $0x148] sm:$0xf]
    %v2256 = vld [vmem:[#allocation8 + $0x14c] sm:$0xf]
    %v2257 = vld [vmem:[#allocation8 + $0x150] sm:$0xf]
    %v2258 = vld [vmem:[#allocation8 + $0x154] sm:$0xf]
    %v2259 = vld [vmem:[#allocation8 + $0x158] sm:$0xf]
    %v2260 = vld [vmem:[#allocation8 + $0x15c] sm:$0xf]
    %v2261 = vld [vmem:[#allocation8 + $0x160] sm:$0xf]
    %v2262 = vld [vmem:[#allocation8 + $0x164] sm:$0xf]
    %v2263 = vld [vmem:[#allocation8 + $0x168] sm:$0xf]
    %v2264 = vld [vmem:[#allocation8 + $0x16c] sm:$0xf]
    %v2265 = vld [vmem:[#allocation8 + $0x170] sm:$0xf]
    %v2266 = vld [vmem:[#allocation8 + $0x174] sm:$0xf]
    %v2267 = vld [vmem:[#allocation8 + $0x178] sm:$0xf]
    %v2268 = vld [vmem:[#allocation8 + $0x17c] sm:$0xf]
    %v2269 = vld [vmem:[#allocation8 + $0x180] sm:$0xf]
    %v2270 = vld [vmem:[#allocation8 + $0x184] sm:$0xf]
    %v2271 = vld [vmem:[#allocation8 + $0x188] sm:$0xf]
    %v2272 = vld [vmem:[#allocation8 + $0x18c] sm:$0xf]
    %v2273 = vld [vmem:[#allocation8 + $0x190] sm:$0xf]
    %v2274 = vld [vmem:[#allocation8 + $0x194] sm:$0xf]
    %v2275 = vld [vmem:[#allocation8 + $0x198] sm:$0xf]
    %v2276 = vld [vmem:[#allocation8 + $0x19c] sm:$0xf]
    %v2277 = vld [vmem:[#allocation8 + $0x1a0] sm:$0xf]
    %v2278 = vld [vmem:[#allocation8 + $0x1a4] sm:$0xf]
    %v2279 = vld [vmem:[#allocation8 + $0x1a8] sm:$0xf]
    %v2280 = vld [vmem:[#allocation8 + $0x1ac] sm:$0xf]
    %v2281 = vld [vmem:[#allocation8 + $0x1b0] sm:$0xf]
    %v2282 = vld [vmem:[#allocation8 + $0x1b4] sm:$0xf]
    %v2283 = vld [vmem:[#allocation8 + $0x1b8] sm:$0xf]
    %v2284 = vld [vmem:[#allocation8 + $0x1bc] sm:$0xf]
    %v2285 = vld [vmem:[#allocation8 + $0x1c0] sm:$0xf]
    %v2286 = vld [vmem:[#allocation8 + $0x1c4] sm:$0xf]
    %v2287 = vld [vmem:[#allocation8 + $0x1c8] sm:$0xf]
    %v2288 = vld [vmem:[#allocation8 + $0x1cc] sm:$0xf]
    %v2289 = vld [vmem:[#allocation8 + $0x1d0] sm:$0xf]
    %v2290 = vld [vmem:[#allocation8 + $0x1d4] sm:$0xf]
    %v2291 = vld [vmem:[#allocation8 + $0x1d8] sm:$0xf]
    %v2292 = vld [vmem:[#allocation8 + $0x1dc] sm:$0xf]
    %v2293 = vld [vmem:[#allocation8 + $0x1e0] sm:$0xf]
    %v2294 = vld [vmem:[#allocation8 + $0x1e4] sm:$0xf]
    %v2295 = vld [vmem:[#allocation8 + $0x1e8] sm:$0xf]
    %v2296 = vld [vmem:[#allocation8 + $0x1ec] sm:$0xf]
    %v2297 = vld [vmem:[#allocation8 + $0x1f0] sm:$0xf]
    %v2298 = vld [vmem:[#allocation8 + $0x1f4] sm:$0xf]
    %v2299 = vld [vmem:[#allocation8 + $0x1f8] sm:$0xf]
    %v2300 = vld [vmem:[#allocation8 + $0x1fc] sm:$0xf]
    %v2301 = vld [vmem:[%s4] sm:$0x1]
    %v2303 = vlaneseq
    %v2304 = vshrl.u32 %v2303, 7
    %v2305 = vsub.s32 0, %v2304
    %v2306 = vrot.slane %v2301, %v2305
    %v2436 = vunpack.c.l.b16 %v2173
    %v2437 = vunpack.c.l.b16 %v2174
    %v2438 = vunpack.c.l.b16 %v2175
    %v2439 = vunpack.c.l.b16 %v2176
    %v2440 = vunpack.c.l.b16 %v2177
    %v2441 = vunpack.c.l.b16 %v2178
    %v2442 = vunpack.c.l.b16 %v2179
    %v2443 = vunpack.c.l.b16 %v2180
    %v2444 = vunpack.c.l.b16 %v2181
    %v2445 = vunpack.c.l.b16 %v2182
    %v2446 = vunpack.c.l.b16 %v2183
    %v2447 = vunpack.c.l.b16 %v2184
    %v2448 = vunpack.c.l.b16 %v2185
    %v2449 = vunpack.c.l.b16 %v2186
    %v2450 = vunpack.c.l.b16 %v2187
    %v2451 = vunpack.c.l.b16 %v2188
    %v2452 = vunpack.c.l.b16 %v2189
    %v2453 = vunpack.c.l.b16 %v2190
    %v2454 = vunpack.c.l.b16 %v2191
    %v2455 = vunpack.c.l.b16 %v2192
    %v2456 = vunpack.c.l.b16 %v2193
    %v2457 = vunpack.c.l.b16 %v2194
    %v2458 = vunpack.c.l.b16 %v2195
    %v2459 = vunpack.c.l.b16 %v2196
    %v2460 = vunpack.c.l.b16 %v2197
    %v2461 = vunpack.c.l.b16 %v2198
    %v2462 = vunpack.c.l.b16 %v2199
    %v2463 = vunpack.c.l.b16 %v2200
    %v2464 = vunpack.c.l.b16 %v2201
    %v2465 = vunpack.c.l.b16 %v2202
    %v2466 = vunpack.c.l.b16 %v2203
    %v2467 = vunpack.c.l.b16 %v2204
    %v2468 = vunpack.c.l.b16 %v2205
    %v2469 = vunpack.c.l.b16 %v2206
    %v2470 = vunpack.c.l.b16 %v2207
    %v2471 = vunpack.c.l.b16 %v2208
    %v2472 = vunpack.c.l.b16 %v2209
    %v2473 = vunpack.c.l.b16 %v2210
    %v2474 = vunpack.c.l.b16 %v2211
    %v2475 = vunpack.c.l.b16 %v2212
    %v2476 = vunpack.c.l.b16 %v2213
    %v2477 = vunpack.c.l.b16 %v2214
    %v2478 = vunpack.c.l.b16 %v2215
    %v2479 = vunpack.c.l.b16 %v2216
    %v2480 = vunpack.c.l.b16 %v2217
    %v2481 = vunpack.c.l.b16 %v2218
    %v2482 = vunpack.c.l.b16 %v2219
    %v2483 = vunpack.c.l.b16 %v2220
    %v2484 = vunpack.c.l.b16 %v2221
    %v2485 = vunpack.c.l.b16 %v2222
    %v2486 = vunpack.c.l.b16 %v2223
    %v2487 = vunpack.c.l.b16 %v2224
    %v2488 = vunpack.c.l.b16 %v2225
    %v2489 = vunpack.c.l.b16 %v2226
    %v2490 = vunpack.c.l.b16 %v2227
    %v2491 = vunpack.c.l.b16 %v2228
    %v2492 = vunpack.c.l.b16 %v2229
    %v2493 = vunpack.c.l.b16 %v2230
    %v2494 = vunpack.c.l.b16 %v2231
    %v2495 = vunpack.c.l.b16 %v2232
    %v2496 = vunpack.c.l.b16 %v2233
    %v2497 = vunpack.c.l.b16 %v2234
    %v2498 = vunpack.c.l.b16 %v2235
    %v2499 = vunpack.c.l.b16 %v2236
    %v2500 = vunpack.c.l.b16 %v2237
    %v2501 = vunpack.c.l.b16 %v2238
    %v2502 = vunpack.c.l.b16 %v2239
    %v2503 = vunpack.c.l.b16 %v2240
    %v2504 = vunpack.c.l.b16 %v2241
    %v2505 = vunpack.c.l.b16 %v2242
    %v2506 = vunpack.c.l.b16 %v2243
    %v2507 = vunpack.c.l.b16 %v2244
    %v2508 = vunpack.c.l.b16 %v2245
    %v2509 = vunpack.c.l.b16 %v2246
    %v2510 = vunpack.c.l.b16 %v2247
    %v2511 = vunpack.c.l.b16 %v2248
    %v2512 = vunpack.c.l.b16 %v2249
    %v2513 = vunpack.c.l.b16 %v2250
    %v2514 = vunpack.c.l.b16 %v2251
    %v2515 = vunpack.c.l.b16 %v2252
    %v2516 = vunpack.c.l.b16 %v2253
    %v2517 = vunpack.c.l.b16 %v2254
    %v2518 = vunpack.c.l.b16 %v2255
    %v2519 = vunpack.c.l.b16 %v2256
    %v2520 = vunpack.c.l.b16 %v2257
    %v2521 = vunpack.c.l.b16 %v2258
    %v2522 = vunpack.c.l.b16 %v2259
    %v2523 = vunpack.c.l.b16 %v2260
    %v2524 = vunpack.c.l.b16 %v2261
    %v2525 = vunpack.c.l.b16 %v2262
    %v2526 = vunpack.c.l.b16 %v2263
    %v2527 = vunpack.c.l.b16 %v2264
    %v2528 = vunpack.c.l.b16 %v2265
    %v2529 = vunpack.c.l.b16 %v2266
    %v2530 = vunpack.c.l.b16 %v2267
    %v2531 = vunpack.c.l.b16 %v2268
    %v2532 = vunpack.c.l.b16 %v2269
    %v2533 = vunpack.c.l.b16 %v2270
    %v2534 = vunpack.c.l.b16 %v2271
    %v2535 = vunpack.c.l.b16 %v2272
    %v2536 = vunpack.c.l.b16 %v2273
    %v2537 = vunpack.c.l.b16 %v2274
    %v2538 = vunpack.c.l.b16 %v2275
    %v2539 = vunpack.c.l.b16 %v2276
    %v2540 = vunpack.c.l.b16 %v2277
    %v2541 = vunpack.c.l.b16 %v2278
    %v2542 = vunpack.c.l.b16 %v2279
    %v2543 = vunpack.c.l.b16 %v2280
    %v2544 = vunpack.c.l.b16 %v2281
    %v2545 = vunpack.c.l.b16 %v2282
    %v2546 = vunpack.c.l.b16 %v2283
    %v2547 = vunpack.c.l.b16 %v2284
    %v2548 = vunpack.c.l.b16 %v2285
    %v2549 = vunpack.c.l.b16 %v2286
    %v2550 = vunpack.c.l.b16 %v2287
    %v2551 = vunpack.c.l.b16 %v2288
    %v2552 = vunpack.c.l.b16 %v2289
    %v2553 = vunpack.c.l.b16 %v2290
    %v2554 = vunpack.c.l.b16 %v2291
    %v2555 = vunpack.c.l.b16 %v2292
    %v2556 = vunpack.c.l.b16 %v2293
    %v2557 = vunpack.c.l.b16 %v2294
    %v2558 = vunpack.c.l.b16 %v2295
    %v2559 = vunpack.c.l.b16 %v2296
    %v2560 = vunpack.c.l.b16 %v2297
    %v2561 = vunpack.c.l.b16 %v2298
    %v2562 = vunpack.c.l.b16 %v2299
    %v2563 = vunpack.c.l.b16 %v2300
    %v2564 = vpack.c.b16 %v2437, %v2436
    %v2565 = vpack.c.b16 %v2439, %v2438
    %v2566 = vpack.c.b16 %v2441, %v2440
    %v2567 = vpack.c.b16 %v2443, %v2442
    %v2568 = vpack.c.b16 %v2445, %v2444
    %v2569 = vpack.c.b16 %v2447, %v2446
    %v2570 = vpack.c.b16 %v2449, %v2448
    %v2571 = vpack.c.b16 %v2451, %v2450
    %v2572 = vpack.c.b16 %v2453, %v2452
    %v2573 = vpack.c.b16 %v2455, %v2454
    %v2574 = vpack.c.b16 %v2457, %v2456
    %v2575 = vpack.c.b16 %v2459, %v2458
    %v2576 = vpack.c.b16 %v2461, %v2460
    %v2577 = vpack.c.b16 %v2463, %v2462
    %v2578 = vpack.c.b16 %v2465, %v2464
    %v2579 = vpack.c.b16 %v2467, %v2466
    %v2580 = vpack.c.b16 %v2469, %v2468
    %v2581 = vpack.c.b16 %v2471, %v2470
    %v2582 = vpack.c.b16 %v2473, %v2472
    %v2583 = vpack.c.b16 %v2475, %v2474
    %v2584 = vpack.c.b16 %v2477, %v2476
    %v2585 = vpack.c.b16 %v2479, %v2478
    %v2586 = vpack.c.b16 %v2481, %v2480
    %v2587 = vpack.c.b16 %v2483, %v2482
    %v2588 = vpack.c.b16 %v2485, %v2484
    %v2589 = vpack.c.b16 %v2487, %v2486
    %v2590 = vpack.c.b16 %v2489, %v2488
    %v2591 = vpack.c.b16 %v2491, %v2490
    %v2592 = vpack.c.b16 %v2493, %v2492
    %v2593 = vpack.c.b16 %v2495, %v2494
    %v2594 = vpack.c.b16 %v2497, %v2496
    %v2595 = vpack.c.b16 %v2499, %v2498
    %v2596 = vpack.c.b16 %v2501, %v2500
    %v2597 = vpack.c.b16 %v2503, %v2502
    %v2598 = vpack.c.b16 %v2505, %v2504
    %v2599 = vpack.c.b16 %v2507, %v2506
    %v2600 = vpack.c.b16 %v2509, %v2508
    %v2601 = vpack.c.b16 %v2511, %v2510
    %v2602 = vpack.c.b16 %v2513, %v2512
    %v2603 = vpack.c.b16 %v2515, %v2514
    %v2604 = vpack.c.b16 %v2517, %v2516
    %v2605 = vpack.c.b16 %v2519, %v2518
    %v2606 = vpack.c.b16 %v2521, %v2520
    %v2607 = vpack.c.b16 %v2523, %v2522
    %v2608 = vpack.c.b16 %v2525, %v2524
    %v2609 = vpack.c.b16 %v2527, %v2526
    %v2610 = vpack.c.b16 %v2529, %v2528
    %v2611 = vpack.c.b16 %v2531, %v2530
    %v2612 = vpack.c.b16 %v2533, %v2532
    %v2613 = vpack.c.b16 %v2535, %v2534
    %v2614 = vpack.c.b16 %v2537, %v2536
    %v2615 = vpack.c.b16 %v2539, %v2538
    %v2616 = vpack.c.b16 %v2541, %v2540
    %v2617 = vpack.c.b16 %v2543, %v2542
    %v2618 = vpack.c.b16 %v2545, %v2544
    %v2619 = vpack.c.b16 %v2547, %v2546
    %v2620 = vpack.c.b16 %v2549, %v2548
    %v2621 = vpack.c.b16 %v2551, %v2550
    %v2622 = vpack.c.b16 %v2553, %v2552
    %v2623 = vpack.c.b16 %v2555, %v2554
    %v2624 = vpack.c.b16 %v2557, %v2556
    %v2625 = vpack.c.b16 %v2559, %v2558
    %v2626 = vpack.c.b16 %v2561, %v2560
    %v2627 = vpack.c.b16 %v2563, %v2562
    %2692 = vmatprep.subr.bf16.mxu0 0
    %2693 = vmatpush1.bf16.msra.mxu0 %v2564
    %2694 = vmatprep.subr.bf16.mxu0 0
    %2695 = vmatpush1.bf16.msra.mxu0 %v2565
    %2696 = vmatprep.subr.bf16.mxu0 0
    %2697 = vmatpush1.bf16.msra.mxu0 %v2566
    %2698 = vmatprep.subr.bf16.mxu0 0
    %2699 = vmatpush1.bf16.msra.mxu0 %v2567
    %2700 = vmatprep.subr.bf16.mxu0 0
    %2701 = vmatpush1.bf16.msra.mxu0 %v2568
    %2702 = vmatprep.subr.bf16.mxu0 0
    %2703 = vmatpush1.bf16.msra.mxu0 %v2569
    %2704 = vmatprep.subr.bf16.mxu0 0
    %2705 = vmatpush1.bf16.msra.mxu0 %v2570
    %2706 = vmatprep.subr.bf16.mxu0 0
    %2707 = vmatpush1.bf16.msra.mxu0 %v2571
    %2708 = vmatprep.subr.bf16.mxu0 0
    %2709 = vmatpush1.bf16.msra.mxu0 %v2572
    %2710 = vmatprep.subr.bf16.mxu0 0
    %2711 = vmatpush1.bf16.msra.mxu0 %v2573
    %2712 = vmatprep.subr.bf16.mxu0 0
    %2713 = vmatpush1.bf16.msra.mxu0 %v2574
    %2714 = vmatprep.subr.bf16.mxu0 0
    %2715 = vmatpush1.bf16.msra.mxu0 %v2575
    %2716 = vmatprep.subr.bf16.mxu0 0
    %2717 = vmatpush1.bf16.msra.mxu0 %v2576
    %2718 = vmatprep.subr.bf16.mxu0 0
    %2719 = vmatpush1.bf16.msra.mxu0 %v2577
    %2720 = vmatprep.subr.bf16.mxu0 0
    %2721 = vmatpush1.bf16.msra.mxu0 %v2578
    %2722 = vmatprep.subr.bf16.mxu0 0
    %2723 = vmatpush1.bf16.msra.mxu0 %v2579
    %2724 = vmatprep.mubr.bf16.mxu0 %v2158
    %2725 = vmatmul.mubr.bf16.gmra.mrb[0].mxu0 %v2157
    %v2726 = vpop.f32.mrb[0].mxu0
    %v2727 = vadd.f32 %v2306, %v2726
    %v2728 = vpop.f32.mrb[0].mxu0
    %v2729 = vpop.f32.mrb[0].mxu0
    %v2730 = vadd.f32 %v2306, %v2729
    %v2731 = vpop.f32.mrb[0].mxu0
    %2732 = vmatprep.mubr.bf16.mxu0 %v2166
    %2733 = vmatmul.mubr.bf16.gmra.mrb[0].mxu0 %v2165
    %v2734 = vpop.f32.mrb[0].mxu0
    %v2735 = vadd.f32 %v2306, %v2734
    %v2736 = vpop.f32.mrb[0].mxu0
    %v2737 = vpop.f32.mrb[0].mxu0
    %v2738 = vadd.f32 %v2306, %v2737
    %v2739 = vpop.f32.mrb[0].mxu0
    %2740 = vdwg.mxu0
    %2741 = vmatprep.subr.bf16.mxu0 0
    %2742 = vmatpush1.bf16.msra.mxu0 %v2580
    %2743 = vmatprep.subr.bf16.mxu0 0
    %2744 = vmatpush1.bf16.msra.mxu0 %v2581
    %2745 = vmatprep.subr.bf16.mxu0 0
    %2746 = vmatpush1.bf16.msra.mxu0 %v2582
    %2747 = vmatprep.subr.bf16.mxu0 0
    %2748 = vmatpush1.bf16.msra.mxu0 %v2583
    %2749 = vmatprep.subr.bf16.mxu0 0
    %2750 = vmatpush1.bf16.msra.mxu0 %v2584
    %2751 = vmatprep.subr.bf16.mxu0 0
    %2752 = vmatpush1.bf16.msra.mxu0 %v2585
    %2753 = vmatprep.subr.bf16.mxu0 0
    %2754 = vmatpush1.bf16.msra.mxu0 %v2586
    %2755 = vmatprep.subr.bf16.mxu0 0
    %2756 = vmatpush1.bf16.msra.mxu0 %v2587
    %2757 = vmatprep.subr.bf16.mxu0 0
    %2758 = vmatpush1.bf16.msra.mxu0 %v2588
    %2759 = vmatprep.subr.bf16.mxu0 0
    %2760 = vmatpush1.bf16.msra.mxu0 %v2589
    %2761 = vmatprep.subr.bf16.mxu0 0
    %2762 = vmatpush1.bf16.msra.mxu0 %v2590
    %2763 = vmatprep.subr.bf16.mxu0 0
    %2764 = vmatpush1.bf16.msra.mxu0 %v2591
    %2765 = vmatprep.subr.bf16.mxu0 0
    %2766 = vmatpush1.bf16.msra.mxu0 %v2592
    %2767 = vmatprep.subr.bf16.mxu0 0
    %2768 = vmatpush1.bf16.msra.mxu0 %v2593
    %2769 = vmatprep.subr.bf16.mxu0 0
    %2770 = vmatpush1.bf16.msra.mxu0 %v2594
    %2771 = vmatprep.subr.bf16.mxu0 0
    %2772 = vmatpush1.bf16.msra.mxu0 %v2595
    %2773 = vmatprep.mubr.bf16.mxu0 %v2160
    %2774 = vmatmul.mubr.bf16.gmra.mrb[0].mxu0 %v2159
    %v2775 = vpop.f32.mrb[0].mxu0
    %v2776 = vadd.f32 %v2727, %v2775
    %v2777 = vpop.f32.mrb[0].mxu0
    %v2778 = vpop.f32.mrb[0].mxu0
    %v2779 = vadd.f32 %v2730, %v2778
    %v2780 = vpop.f32.mrb[0].mxu0
    %2781 = vmatprep.mubr.bf16.mxu0 %v2168
    %2782 = vmatmul.mubr.bf16.gmra.mrb[0].mxu0 %v2167
    %v2783 = vpop.f32.mrb[0].mxu0
    %v2784 = vadd.f32 %v2735, %v2783
    %v2785 = vpop.f32.mrb[0].mxu0
    %v2786 = vpop.f32.mrb[0].mxu0
    %v2787 = vadd.f32 %v2738, %v2786
    %v2788 = vpop.f32.mrb[0].mxu0
    %2789 = vdwg.mxu0
    %2790 = vmatprep.subr.bf16.mxu0 0
    %2791 = vmatpush1.bf16.msra.mxu0 %v2596
    %2792 = vmatprep.subr.bf16.mxu0 0
    %2793 = vmatpush1.bf16.msra.mxu0 %v2597
    %2794 = vmatprep.subr.bf16.mxu0 0
    %2795 = vmatpush1.bf16.msra.mxu0 %v2598
    %2796 = vmatprep.subr.bf16.mxu0 0
    %2797 = vmatpush1.bf16.msra.mxu0 %v2599
    %2798 = vmatprep.subr.bf16.mxu0 0
    %2799 = vmatpush1.bf16.msra.mxu0 %v2600
    %2800 = vmatprep.subr.bf16.mxu0 0
    %2801 = vmatpush1.bf16.msra.mxu0 %v2601
    %2802 = vmatprep.subr.bf16.mxu0 0
    %2803 = vmatpush1.bf16.msra.mxu0 %v2602
    %2804 = vmatprep.subr.bf16.mxu0 0
    %2805 = vmatpush1.bf16.msra.mxu0 %v2603
    %2806 = vmatprep.subr.bf16.mxu0 0
    %2807 = vmatpush1.bf16.msra.mxu0 %v2604
    %2808 = vmatprep.subr.bf16.mxu0 0
    %2809 = vmatpush1.bf16.msra.mxu0 %v2605
    %2810 = vmatprep.subr.bf16.mxu0 0
    %2811 = vmatpush1.bf16.msra.mxu0 %v2606
    %2812 = vmatprep.subr.bf16.mxu0 0
    %2813 = vmatpush1.bf16.msra.mxu0 %v2607
    %2814 = vmatprep.subr.bf16.mxu0 0
    %2815 = vmatpush1.bf16.msra.mxu0 %v2608
    %2816 = vmatprep.subr.bf16.mxu0 0
    %2817 = vmatpush1.bf16.msra.mxu0 %v2609
    %2818 = vmatprep.subr.bf16.mxu0 0
    %2819 = vmatpush1.bf16.msra.mxu0 %v2610
    %2820 = vmatprep.subr.bf16.mxu0 0
    %2821 = vmatpush1.bf16.msra.mxu0 %v2611
    %2822 = vmatprep.mubr.bf16.mxu0 %v2162
    %2823 = vmatmul.mubr.bf16.gmra.mrb[0].mxu0 %v2161
    %v2824 = vpop.f32.mrb[0].mxu0
    %v2825 = vadd.f32 %v2776, %v2824
    %v2826 = vpop.f32.mrb[0].mxu0
    %v2827 = vpop.f32.mrb[0].mxu0
    %v2828 = vadd.f32 %v2779, %v2827
    %v2829 = vpop.f32.mrb[0].mxu0
    %2830 = vmatprep.mubr.bf16.mxu0 %v2170
    %2831 = vmatmul.mubr.bf16.gmra.mrb[0].mxu0 %v2169
    %v2832 = vpop.f32.mrb[0].mxu0
    %v2833 = vadd.f32 %v2784, %v2832
    %v2834 = vpop.f32.mrb[0].mxu0
    %v2835 = vpop.f32.mrb[0].mxu0
    %v2836 = vadd.f32 %v2787, %v2835
    %v2837 = vpop.f32.mrb[0].mxu0
    %2838 = vdwg.mxu0
    %2839 = vmatprep.subr.bf16.mxu0 0
    %2840 = vmatpush1.bf16.msra.mxu0 %v2612
    %2841 = vmatprep.subr.bf16.mxu0 0
    %2842 = vmatpush1.bf16.msra.mxu0 %v2613
    %2843 = vmatprep.subr.bf16.mxu0 0
    %2844 = vmatpush1.bf16.msra.mxu0 %v2614
    %2845 = vmatprep.subr.bf16.mxu0 0
    %2846 = vmatpush1.bf16.msra.mxu0 %v2615
    %2847 = vmatprep.subr.bf16.mxu0 0
    %2848 = vmatpush1.bf16.msra.mxu0 %v2616
    %2849 = vmatprep.subr.bf16.mxu0 0
    %2850 = vmatpush1.bf16.msra.mxu0 %v2617
    %2851 = vmatprep.subr.bf16.mxu0 0
    %2852 = vmatpush1.bf16.msra.mxu0 %v2618
    %2853 = vmatprep.subr.bf16.mxu0 0
    %2854 = vmatpush1.bf16.msra.mxu0 %v2619
    %2855 = vmatprep.subr.bf16.mxu0 0
    %2856 = vmatpush1.bf16.msra.mxu0 %v2620
    %2857 = vmatprep.subr.bf16.mxu0 0
    %2858 = vmatpush1.bf16.msra.mxu0 %v2621
    %2859 = vmatprep.subr.bf16.mxu0 0
    %2860 = vmatpush1.bf16.msra.mxu0 %v2622
    %2861 = vmatprep.subr.bf16.mxu0 0
    %2862 = vmatpush1.bf16.msra.mxu0 %v2623
    %2863 = vmatprep.subr.bf16.mxu0 0
    %2864 = vmatpush1.bf16.msra.mxu0 %v2624
    %2865 = vmatprep.subr.bf16.mxu0 0
    %2866 = vmatpush1.bf16.msra.mxu0 %v2625
    %2867 = vmatprep.subr.bf16.mxu0 0
    %2868 = vmatpush1.bf16.msra.mxu0 %v2626
    %2869 = vmatprep.subr.bf16.mxu0 0
    %2870 = vmatpush1.bf16.msra.mxu0 %v2627
    %2871 = vmatprep.mubr.bf16.mxu0 %v2164
    %2872 = vmatmul.mubr.bf16.gmra.mrb[0].mxu0 %v2163
    %v2873 = vpop.f32.mrb[0].mxu0
    %v2874 = vadd.f32 %v2825, %v2873
    %v2875 = vpop.f32.mrb[0].mxu0
    %v2876 = vpop.f32.mrb[0].mxu0
    %v2877 = vadd.f32 %v2828, %v2876
    %v2878 = vpop.f32.mrb[0].mxu0
    %2879 = vmatprep.mubr.bf16.mxu0 %v2172
    %2880 = vmatmul.mubr.bf16.gmra.mrb[0].mxu0 %v2171
    %v2881 = vpop.f32.mrb[0].mxu0
    %v2882 = vadd.f32 %v2833, %v2881
    %v2883 = vpop.f32.mrb[0].mxu0
    %v2884 = vpop.f32.mrb[0].mxu0
    %v2885 = vadd.f32 %v2836, %v2884
    %v2886 = vpop.f32.mrb[0].mxu0
    %2887 = vdwg.mxu0
    %2888 = vst [vmem:[#allocation10] sm:$0xff] %v2874
    %2889 = vst [vmem:[#allocation10 + $0x8] sm:$0xff] %v2877
    %2890 = vst [vmem:[#allocation10 + $0x10] sm:$0xff] %v2882
    %2891 = vst [vmem:[#allocation10 + $0x18] sm:$0xff] %v2885
    // Predicated region
    $region38: #{tpu_custom_call.1} parent=1 // pred_check
      _
    $region39: #{tpu_custom_call.1} parent=1 // pred_check_branch
      %2893 = sbr.rel (0) target = $region41
    $region40: #{tpu_custom_call.1} parent=1 // pred_region
      %s2895 = ssub.s32 512, 512
      %2896 = vsyncadd [#allocation4], %s2895
      %s2897 = sshll.u32 [#allocation10], 4
      %s2898 = int_to_ptr.vmem [resolvable:$true] %s2897
      %2903 = dma.vmem_to_hbm [thread:$0]  %s2898, 512, %s5, [#allocation4], 128, 128, 8
    $region41: #{tpu_custom_call.1} parent=1 // pred_fallthru
      _
    // Predicated region
    $region42: #{tpu_custom_call.1} parent=1 // pred_check
      _
    $region43: #{tpu_custom_call.1} parent=1 // pred_check_branch
      %2905 = sbr.rel (0) target = $region45
    $region44: #{tpu_custom_call.1} parent=1 // pred_region
      %2906 = dma.done [#allocation4], 512
    $region45: #{tpu_custom_call.1} parent=1 // pred_fallthru
      _
    %2907 = vsyncpa [#allocation3], 1
    %2908 = vsyncpa [#allocation6], 1
    %2909 = vsyncpa [#allocation9], 1
    %2910 = vsyncpa [#allocation4], 1

</llo_original>
